<compile_context>
chip_gen: v7x
topology: tpu7x:2x2x1
jax: 0.10.0
libtpu: 0.0.40
codegen_flags: <defaults>
</compile_context>

<pallas_src>
import jax
import jax.numpy as jnp
from jax.experimental import pallas as pl
from jax.experimental.pallas import tpu as pltpu

D_IN, D1, D2, D3, D_OUT = 2500, 256, 128, 64, 2
D_IN_PAD = 2560      # next multiple of 128 above 2500
D_OUT_PAD = 128      # lane-dense output width
NEG = -1e30          # bias for padded class columns (vanishes under softmax)


def _round_up(n, m):
    return (n + m - 1) // m * m


def mlp_kernel(x_ref, w1_ref, b1_ref, w2_ref, b2_ref, w3_ref, b3_ref,
               w4_ref, b4_ref, o_ref):
    # fc1 (dominant layer): bf16 x / w1 on the MXU, f32 accumulation.
    h = jnp.dot(x_ref[...], w1_ref[...],
                preferred_element_type=jnp.float32) + b1_ref[...]
    h = jnp.maximum(h, 0.0)
    # Dropout(p=0.2) == identity in eval mode.
    # fc2 + ReLU (tiny, f32)
    h = jnp.dot(h, w2_ref[...],
                preferred_element_type=jnp.float32) + b2_ref[...]
    h = jnp.maximum(h, 0.0)
    # fc3 + ReLU
    h = jnp.dot(h, w3_ref[...],
                preferred_element_type=jnp.float32) + b3_ref[...]
    h = jnp.maximum(h, 0.0)
    # fc4 (class dim padded to 128; padded columns carry a -1e30 bias)
    logits = jnp.dot(h, w4_ref[...],
                     preferred_element_type=jnp.float32) + b4_ref[...]
    # log_softmax over the class axis. exp(NEG - m) == 0 for padded columns,
    # so the padding does not perturb the real 2-class result.
    m = jnp.max(logits, axis=1, keepdims=True)
    lse = m + jnp.log(jnp.sum(jnp.exp(logits - m), axis=1, keepdims=True))
    o_ref[...] = logits - lse


def _tile_map(i):        # batch-tiled operands
    return (i, 0)


def _resident_map(i):    # weights/biases: same full block every grid step
    return (0, 0)


def mlp_forward(x, params, *, tb=256):
    """x: (B, 2500) float32; params: dict of f32 weights (in,out) and biases (1,out)."""
    B = x.shape[0]
    tb = min(tb, _round_up(B, 8))        # small batches: one tile, 8-aligned
    b_pad = _round_up(B, tb)

    # bf16 + 128-aligned K for the layer-1 stream.
    xp = jnp.zeros((b_pad, D_IN_PAD), jnp.bfloat16)
    xp = xp.at[:B, :D_IN].set(x.astype(jnp.bfloat16))
    w1 = jnp.zeros((D_IN_PAD, D1), jnp.bfloat16)
    w1 = w1.at[:D_IN, :].set(params["w1"].astype(jnp.bfloat16))
    b1 = params["b1"].astype(jnp.float32)
    w2, b2 = params["w2"], params["b2"]
    w3, b3 = params["w3"], params["b3"]
    # Lane-dense output: pad the class dim to 128 (zero weights, -1e30 bias).
    w4 = jnp.zeros((D3, D_OUT_PAD), jnp.float32).at[:, :D_OUT].set(params["w4"])
    b4 = jnp.full((1, D_OUT_PAD), NEG, jnp.float32).at[:, :D_OUT].set(params["b4"])

    args = (xp, w1, b1, w2, b2, w3, b3, w4, b4)

    in_specs = [pl.BlockSpec((tb, D_IN_PAD), _tile_map)]
    in_specs += [pl.BlockSpec(a.shape, _resident_map) for a in args[1:]]
    out_specs = pl.BlockSpec((tb, D_OUT_PAD), _tile_map)

    out = pl.pallas_call(
        mlp_kernel,
        out_shape=jax.ShapeDtypeStruct((b_pad, D_OUT_PAD), jnp.float32),
        grid=(b_pad // tb,),
        in_specs=in_specs,
        out_specs=out_specs,
        compiler_params=pltpu.CompilerParams(
            dimension_semantics=("parallel",)),
    )(*args)
    return out[:B, :D_OUT]


def mlp_reference(x, params):
    h = jnp.maximum(x @ params["w1"] + params["b1"], 0.0)
    h = jnp.maximum(h @ params["w2"] + params["b2"], 0.0)
    h = jnp.maximum(h @ params["w3"] + params["b3"], 0.0)
    logits = h @ params["w4"] + params["b4"]
    return jax.nn.log_softmax(logits, axis=1)


def init_params(key):
    """Deterministic init mimicking nn.Linear's U(-1/sqrt(fan_in), 1/sqrt(fan_in))."""
    dims = [D_IN, D1, D2, D3, D_OUT]
    params = {}
    for i in range(4):
        fan_in, fan_out = dims[i], dims[i + 1]
        key, kw, kb = jax.random.split(key, 3)
        bound = 1.0 / jnp.sqrt(fan_in)
        params[f"w{i+1}"] = jax.random.uniform(
            kw, (fan_in, fan_out), jnp.float32, -bound, bound)
        params[f"b{i+1}"] = jax.random.uniform(
            kb, (1, fan_out), jnp.float32, -bound, bound)
    return params


if __name__ == "__main__":
    key = jax.random.PRNGKey(0)
    key, kx = jax.random.split(key)

    B = 4
    x = jax.random.normal(kx, (B, 2500), jnp.float32)
    params = init_params(key)

    out = mlp_forward(x, params)
    out = jax.block_until_ready(out)

    # sanity: shape, and log_softmax rows exponentiate-sum to 1
    assert out.shape == (B, D_OUT)
    row_sums = jnp.exp(out).sum(axis=1)
    assert jnp.allclose(row_sums, 1.0, atol=1e-4)

    # loose check against a pure-JAX f32 reference (bf16 layer-1 tolerance)
    ref = mlp_reference(x, params)
    assert jnp.max(jnp.abs(out - ref)) < 5e-2

    print("KERNEL_OK")
</pallas_src>

<mosaic_0001>
module attributes {stable_mosaic.version = 11 : i64} {
  func.func @mlp_kernel(%arg0: i32, %arg1: memref<8x2560xbf16, #tpu.memory_space<vmem>>, %arg2: memref<2560x256xbf16, #tpu.memory_space<vmem>>, %arg3: memref<1x256xf32, #tpu.memory_space<vmem>>, %arg4: memref<256x128xf32, #tpu.memory_space<vmem>>, %arg5: memref<1x128xf32, #tpu.memory_space<vmem>>, %arg6: memref<128x64xf32, #tpu.memory_space<vmem>>, %arg7: memref<1x64xf32, #tpu.memory_space<vmem>>, %arg8: memref<64x128xf32, #tpu.memory_space<vmem>>, %arg9: memref<1x128xf32, #tpu.memory_space<vmem>>, %arg10: memref<8x128xf32, #tpu.memory_space<vmem>>) attributes {dimension_semantics = [#tpu.dimension_semantics<parallel>], iteration_bounds = array<i64: 1>, scalar_prefetch = 0 : i64, scratch_operands = 0 : i64, tpu.core_type = #tpu.core_type<tc>, window_params = [{transform_indices = @transform_0, window_bounds = array<i64: 8, 2560>}, {pipeline_mode = #tpu.pipeline_mode<synchronous>, transform_indices = @transform_1, window_bounds = array<i64: 2560, 256>}, {pipeline_mode = #tpu.pipeline_mode<synchronous>, transform_indices = @transform_2, window_bounds = array<i64: 1, 256>}, {pipeline_mode = #tpu.pipeline_mode<synchronous>, transform_indices = @transform_3, window_bounds = array<i64: 256, 128>}, {pipeline_mode = #tpu.pipeline_mode<synchronous>, transform_indices = @transform_4, window_bounds = array<i64: 1, 128>}, {pipeline_mode = #tpu.pipeline_mode<synchronous>, transform_indices = @transform_5, window_bounds = array<i64: 128, 64>}, {pipeline_mode = #tpu.pipeline_mode<synchronous>, transform_indices = @transform_6, window_bounds = array<i64: 1, 64>}, {pipeline_mode = #tpu.pipeline_mode<synchronous>, transform_indices = @transform_7, window_bounds = array<i64: 64, 128>}, {pipeline_mode = #tpu.pipeline_mode<synchronous>, transform_indices = @transform_8, window_bounds = array<i64: 1, 128>}, {transform_indices = @transform_9, window_bounds = array<i64: 8, 128>}]} {
    %c0 = arith.constant 0 : index
    %c0_0 = arith.constant 0 : index
    %0 = vector.load %arg1[%c0, %c0_0] : memref<8x2560xbf16, #tpu.memory_space<vmem>>, vector<8x2560xbf16>
    %c0_1 = arith.constant 0 : index
    %c0_2 = arith.constant 0 : index
    %1 = vector.load %arg2[%c0_1, %c0_2] : memref<2560x256xbf16, #tpu.memory_space<vmem>>, vector<2560x256xbf16>
    %cst = arith.constant dense<0.000000e+00> : vector<8x256xf32>
    %2 = tpu.matmul %0, %1, %cst {dimension_numbers = #tpu.dot_dimension_numbers<[1], [0], [0], [1], [0, 0, 1, 1], [], []>} : vector<8x2560xbf16>, vector<2560x256xbf16>, vector<8x256xf32> -> vector<8x256xf32>
    %c0_3 = arith.constant 0 : index
    %c0_4 = arith.constant 0 : index
    %3 = vector.load %arg3[%c0_3, %c0_4] : memref<1x256xf32, #tpu.memory_space<vmem>>, vector<1x256xf32>
    %4 = vector.broadcast %3 : vector<1x256xf32> to vector<8x256xf32>
    %5 = arith.addf %2, %4 : vector<8x256xf32>
    %cst_5 = arith.constant 0.000000e+00 : f32
    %6 = vector.broadcast %cst_5 : f32 to vector<8x256xf32>
    %7 = arith.maximumf %5, %6 : vector<8x256xf32>
    %c0_6 = arith.constant 0 : index
    %c0_7 = arith.constant 0 : index
    %8 = vector.load %arg4[%c0_6, %c0_7] : memref<256x128xf32, #tpu.memory_space<vmem>>, vector<256x128xf32>
    %cst_8 = arith.constant dense<0.000000e+00> : vector<8x128xf32>
    %9 = tpu.matmul %7, %8, %cst_8 {dimension_numbers = #tpu.dot_dimension_numbers<[1], [0], [0], [1], [0, 0, 1, 1], [], []>} : vector<8x256xf32>, vector<256x128xf32>, vector<8x128xf32> -> vector<8x128xf32>
    %c0_9 = arith.constant 0 : index
    %c0_10 = arith.constant 0 : index
    %10 = vector.load %arg5[%c0_9, %c0_10] : memref<1x128xf32, #tpu.memory_space<vmem>>, vector<1x128xf32>
    %11 = vector.broadcast %10 : vector<1x128xf32> to vector<8x128xf32>
    %12 = arith.addf %9, %11 : vector<8x128xf32>
    %cst_11 = arith.constant 0.000000e+00 : f32
    %13 = vector.broadcast %cst_11 : f32 to vector<8x128xf32>
    %14 = arith.maximumf %12, %13 : vector<8x128xf32>
    %c0_12 = arith.constant 0 : index
    %c0_13 = arith.constant 0 : index
    %15 = vector.load %arg6[%c0_12, %c0_13] : memref<128x64xf32, #tpu.memory_space<vmem>>, vector<128x64xf32>
    %cst_14 = arith.constant dense<0.000000e+00> : vector<8x64xf32>
    %16 = tpu.matmul %14, %15, %cst_14 {dimension_numbers = #tpu.dot_dimension_numbers<[1], [0], [0], [1], [0, 0, 1, 1], [], []>} : vector<8x128xf32>, vector<128x64xf32>, vector<8x64xf32> -> vector<8x64xf32>
    %c0_15 = arith.constant 0 : index
    %c0_16 = arith.constant 0 : index
    %17 = vector.load %arg7[%c0_15, %c0_16] : memref<1x64xf32, #tpu.memory_space<vmem>>, vector<1x64xf32>
    %18 = vector.broadcast %17 : vector<1x64xf32> to vector<8x64xf32>
    %19 = arith.addf %16, %18 : vector<8x64xf32>
    %cst_17 = arith.constant 0.000000e+00 : f32
    %20 = vector.broadcast %cst_17 : f32 to vector<8x64xf32>
    %21 = arith.maximumf %19, %20 : vector<8x64xf32>
    %c0_18 = arith.constant 0 : index
    %c0_19 = arith.constant 0 : index
    %22 = vector.load %arg8[%c0_18, %c0_19] : memref<64x128xf32, #tpu.memory_space<vmem>>, vector<64x128xf32>
    %cst_20 = arith.constant dense<0.000000e+00> : vector<8x128xf32>
    %23 = tpu.matmul %21, %22, %cst_20 {dimension_numbers = #tpu.dot_dimension_numbers<[1], [0], [0], [1], [0, 0, 1, 1], [], []>} : vector<8x64xf32>, vector<64x128xf32>, vector<8x128xf32> -> vector<8x128xf32>
    %c0_21 = arith.constant 0 : index
    %c0_22 = arith.constant 0 : index
    %24 = vector.load %arg9[%c0_21, %c0_22] : memref<1x128xf32, #tpu.memory_space<vmem>>, vector<1x128xf32>
    %25 = vector.broadcast %24 : vector<1x128xf32> to vector<8x128xf32>
    %26 = arith.addf %23, %25 : vector<8x128xf32>
    %cst_23 = arith.constant dense<0xFF800000> : vector<8xf32>
    %27 = vector.multi_reduction <maximumf>, %26, %cst_23 [1] : vector<8x128xf32> to vector<8xf32>
    %28 = vector.shape_cast %27 : vector<8xf32> to vector<8x1xf32>
    %29 = vector.broadcast %28 : vector<8x1xf32> to vector<8x128xf32>
    %30 = arith.subf %26, %29 : vector<8x128xf32>
    %31 = math.exp %30 : vector<8x128xf32>
    %cst_24 = arith.constant dense<0.000000e+00> : vector<8xf32>
    %32 = vector.multi_reduction <add>, %31, %cst_24 [1] : vector<8x128xf32> to vector<8xf32>
    %33 = vector.shape_cast %32 : vector<8xf32> to vector<8x1xf32>
    %34 = math.log %33 : vector<8x1xf32>
    %35 = arith.addf %28, %34 : vector<8x1xf32>
    %36 = vector.broadcast %35 : vector<8x1xf32> to vector<8x128xf32>
    %37 = arith.subf %26, %36 : vector<8x128xf32>
    %c0_25 = arith.constant 0 : index
    %c0_26 = arith.constant 0 : index
    %38 = vector.load %arg10[%c0_25, %c0_26] : memref<8x128xf32, #tpu.memory_space<vmem>>, vector<8x128xf32>
    tpu.vector_store %arg10[%c0_25, %c0_26], %37 {strides = array<i32>} : memref<8x128xf32, #tpu.memory_space<vmem>>, vector<8x128xf32>,
    return
  }
  func.func @transform_0(%arg0: i32) -> (i32, i32) {
    %c0_i32 = arith.constant 0 : i32
    %c0_i32_0 = arith.constant 0 : i32
    return %arg0, %c0_i32 : i32, i32
  }
  func.func @transform_1(%arg0: i32) -> (i32, i32) {
    %c0_i32 = arith.constant 0 : i32
    %c0_i32_0 = arith.constant 0 : i32
    %c0_i32_1 = arith.constant 0 : i32
    return %c0_i32, %c0_i32_0 : i32, i32
  }
  func.func @transform_2(%arg0: i32) -> (i32, i32) {
    %c0_i32 = arith.constant 0 : i32
    %c0_i32_0 = arith.constant 0 : i32
    %c0_i32_1 = arith.constant 0 : i32
    return %c0_i32, %c0_i32_0 : i32, i32
  }
  func.func @transform_3(%arg0: i32) -> (i32, i32) {
    %c0_i32 = arith.constant 0 : i32
    %c0_i32_0 = arith.constant 0 : i32
    %c0_i32_1 = arith.constant 0 : i32
    return %c0_i32, %c0_i32_0 : i32, i32
  }
  func.func @transform_4(%arg0: i32) -> (i32, i32) {
    %c0_i32 = arith.constant 0 : i32
    %c0_i32_0 = arith.constant 0 : i32
    %c0_i32_1 = arith.constant 0 : i32
    return %c0_i32, %c0_i32_0 : i32, i32
  }
  func.func @transform_5(%arg0: i32) -> (i32, i32) {
    %c0_i32 = arith.constant 0 : i32
    %c0_i32_0 = arith.constant 0 : i32
    %c0_i32_1 = arith.constant 0 : i32
    return %c0_i32, %c0_i32_0 : i32, i32
  }
  func.func @transform_6(%arg0: i32) -> (i32, i32) {
    %c0_i32 = arith.constant 0 : i32
    %c0_i32_0 = arith.constant 0 : i32
    %c0_i32_1 = arith.constant 0 : i32
    return %c0_i32, %c0_i32_0 : i32, i32
  }
  func.func @transform_7(%arg0: i32) -> (i32, i32) {
    %c0_i32 = arith.constant 0 : i32
    %c0_i32_0 = arith.constant 0 : i32
    %c0_i32_1 = arith.constant 0 : i32
    return %c0_i32, %c0_i32_0 : i32, i32
  }
  func.func @transform_8(%arg0: i32) -> (i32, i32) {
    %c0_i32 = arith.constant 0 : i32
    %c0_i32_0 = arith.constant 0 : i32
    %c0_i32_1 = arith.constant 0 : i32
    return %c0_i32, %c0_i32_0 : i32, i32
  }
  func.func @transform_9(%arg0: i32) -> (i32, i32) {
    %c0_i32 = arith.constant 0 : i32
    %c0_i32_0 = arith.constant 0 : i32
    return %arg0, %c0_i32 : i32, i32
  }
}

</mosaic_0001>

<llo_original>
// kernel: tpu_custom_call.1
$region0: #{tpu_custom_call.1}
  #allocation0 [shape = 'u32[]', space=smem, size = 0x4, offset = 0x4, fixed_abs, tag = 'smem constant byte address 0x4 - core index']
  #allocation1 [shape = 'u32[144,128]{1,0:T(1,128)}', space=vmem, size = 0x12000, scoped, tag = 'internal scratch']
  %s0 = inlined_call_operand.hbm [shape: bf16[8,2560], index: 0, kind: input, shape index: {}]
  %s1 = inlined_call_operand.hbm [shape: bf16[2560,256], index: 1, kind: input, shape index: {}]
  %s2 = inlined_call_operand.hbm [shape: f32[1,256], index: 2, kind: input, shape index: {}]
  %s3 = inlined_call_operand.hbm [shape: f32[256,128], index: 3, kind: input, shape index: {}]
  %s4 = inlined_call_operand.hbm [shape: f32[1,128], index: 4, kind: input, shape index: {}]
  %s5 = inlined_call_operand.vmem [shape: f32[128,64], index: 5, kind: input, shape index: {}]
  %s6 = inlined_call_operand.hbm [shape: f32[1,64], index: 6, kind: input, shape index: {}]
  %s7 = inlined_call_operand.hbm [shape: f32[64,128], index: 7, kind: input, shape index: {}]
  %s8 = inlined_call_operand.hbm [shape: f32[1,128], index: 8, kind: input, shape index: {}]
  %s9 = inlined_call_operand.hbm [shape: f32[8,128], index: 9, kind: output, shape index: {}]
  %s10 = sld [smem:[#allocation0]]
  $region78: #{tpu_custom_call.1} parent=0
    _
  %s12 = ssub.s32 1, %s10
  %s13 = scalar_select 0, %s12, %s10
  $region1: #{tpu_custom_call.1} parent=0
    #allocation2 [shape = 'u8[40960]{0}', space=vmem, size = 0xa000, scoped, tag = 'input window, operand 0, single buffered']
    #allocation3 [shape = 's32[1]{0}', space=sflag, size = 0x4, scoped, tag = 'scoped memory for tpu_custom_call.1']
    #allocation4 [shape = 's32[1]{0}', space=sflag, size = 0x4, scoped, tag = 'scoped memory for tpu_custom_call.1']
    #allocation5 [shape = 'u8[1310720]{0}', space=vmem, size = 0x140000, scoped, tag = 'input window, operand 1, single buffered']
    #allocation6 [shape = 's32[1]{0}', space=sflag, size = 0x4, scoped, tag = 'scoped memory for tpu_custom_call.1']
    #allocation7 [shape = 'u8[1024]{0}', space=vmem, size = 0x400, scoped, tag = 'input window, operand 2, single buffered']
    #allocation8 [shape = 'u8[131072]{0}', space=vmem, size = 0x20000, scoped, tag = 'input window, operand 3, single buffered']
    #allocation9 [shape = 's32[1]{0}', space=sflag, size = 0x4, scoped, tag = 'scoped memory for tpu_custom_call.1']
    #allocation10 [shape = 'u8[512]{0}', space=vmem, size = 0x400, scoped, tag = 'input window, operand 4, single buffered']
    #allocation11 [shape = 'u8[512]{0}', space=vmem, size = 0x400, scoped, tag = 'input window, operand 6, single buffered']
    #allocation12 [shape = 's32[1]{0}', space=sflag, size = 0x4, scoped, tag = 'scoped memory for tpu_custom_call.1']
    #allocation13 [shape = 'u8[32768]{0}', space=vmem, size = 0x8000, scoped, tag = 'input window, operand 7, single buffered']
    #allocation14 [shape = 'u8[512]{0}', space=vmem, size = 0x400, scoped, tag = 'input window, operand 8, single buffered']
    #allocation15 [shape = 's32[1]{0}', space=sflag, size = 0x4, scoped, tag = 'scoped memory for tpu_custom_call.1']
    #allocation16 [shape = 'u8[4096]{0}', space=vmem, size = 0x1000, scoped, tag = 'output window, operand 0, single buffered']
    %14 = vsyncpa [#allocation3], 0
    %15 = vsyncpa [#allocation6], 0
    %16 = vsyncpa [#allocation9], 0
    %17 = vsyncpa [#allocation12], 0
    %18 = vsyncpa [#allocation15], 0
    %19 = vsyncpa [#allocation4], 0
    // Predicated region
    $region2: #{tpu_custom_call.1} parent=1 // pred_check
      _
    $region3: #{tpu_custom_call.1} parent=1 // pred_check_branch
      %21 = sbr.rel (0) target = $region5
    $region4: #{tpu_custom_call.1} parent=1 // pred_region
      %s23 = ssub.s32 1280, 1280
      %24 = vsyncadd [#allocation3], %s23
      %s26 = sshll.u32 [#allocation2], 4
      %s27 = int_to_ptr.vmem [resolvable:$true] %s26
      %29 = dma.hbm_to_vmem [thread:$0]  %s0, 1280, %s27, [#allocation3]
    $region5: #{tpu_custom_call.1} parent=1 // pred_fallthru
      _
    // Predicated region
    $region6: #{tpu_custom_call.1} parent=1 // pred_check
      _
    $region7: #{tpu_custom_call.1} parent=1 // pred_check_branch
      %31 = sbr.rel (0) target = $region9
    $region8: #{tpu_custom_call.1} parent=1 // pred_region
      %s33 = ssub.s32 40960, 40960
      %34 = vsyncadd [#allocation6], %s33
      %s35 = sshll.u32 [#allocation5], 4
      %s36 = int_to_ptr.vmem [resolvable:$true] %s35
      %41 = dma.hbm_to_vmem [thread:$0]  %s1, 40960, %s36, [#allocation6], 128, 128, 8
    $region9: #{tpu_custom_call.1} parent=1 // pred_fallthru
      _
    // Predicated region
    $region10: #{tpu_custom_call.1} parent=1 // pred_check
      _
    $region11: #{tpu_custom_call.1} parent=1 // pred_check_branch
      %43 = sbr.rel (0) target = $region13
    $region12: #{tpu_custom_call.1} parent=1 // pred_region
      %s45 = ssub.s32 32, 32
      %46 = vsyncadd [#allocation6], %s45
      %s48 = sshll.u32 [#allocation7], 4
      %s49 = int_to_ptr.vmem [resolvable:$true] %s48
      %51 = dma.hbm_to_vmem [thread:$0]  %s2, 32, %s49, [#allocation6]
    $region13: #{tpu_custom_call.1} parent=1 // pred_fallthru
      _
    // Predicated region
    $region14: #{tpu_custom_call.1} parent=1 // pred_check
      _
    $region15: #{tpu_custom_call.1} parent=1 // pred_check_branch
      %53 = sbr.rel (0) target = $region17
    $region16: #{tpu_custom_call.1} parent=1 // pred_region
      %s55 = ssub.s32 4096, 4096
      %56 = vsyncadd [#allocation9], %s55
      %s57 = sshll.u32 [#allocation8], 4
      %s58 = int_to_ptr.vmem [resolvable:$true] %s57
      %63 = dma.hbm_to_vmem [thread:$0]  %s3, 4096, %s58, [#allocation9], 128, 128, 8
    $region17: #{tpu_custom_call.1} parent=1 // pred_fallthru
      _
    // Predicated region
    $region18: #{tpu_custom_call.1} parent=1 // pred_check
      _
    $region19: #{tpu_custom_call.1} parent=1 // pred_check_branch
      %65 = sbr.rel (0) target = $region21
    $region20: #{tpu_custom_call.1} parent=1 // pred_region
      %s67 = ssub.s32 16, 16
      %68 = vsyncadd [#allocation9], %s67
      %s70 = sshll.u32 [#allocation10], 4
      %s71 = int_to_ptr.vmem [resolvable:$true] %s70
      %73 = dma.hbm_to_vmem [thread:$0]  %s4, 16, %s71, [#allocation9]
    $region21: #{tpu_custom_call.1} parent=1 // pred_fallthru
      _
    // Predicated region
    $region22: #{tpu_custom_call.1} parent=1 // pred_check
      _
    $region23: #{tpu_custom_call.1} parent=1 // pred_check_branch
      %75 = sbr.rel (0) target = $region25
    $region24: #{tpu_custom_call.1} parent=1 // pred_region
      _
    $region25: #{tpu_custom_call.1} parent=1 // pred_fallthru
      _
    // Predicated region
    $region26: #{tpu_custom_call.1} parent=1 // pred_check
      _
    $region27: #{tpu_custom_call.1} parent=1 // pred_check_branch
      %77 = sbr.rel (0) target = $region29
    $region28: #{tpu_custom_call.1} parent=1 // pred_region
      %s79 = ssub.s32 16, 16
      %80 = vsyncadd [#allocation12], %s79
      %s82 = sshll.u32 [#allocation11], 4
      %s83 = int_to_ptr.vmem [resolvable:$true] %s82
      %85 = dma.hbm_to_vmem [thread:$0]  %s6, 16, %s83, [#allocation12]
    $region29: #{tpu_custom_call.1} parent=1 // pred_fallthru
      _
    // Predicated region
    $region30: #{tpu_custom_call.1} parent=1 // pred_check
      _
    $region31: #{tpu_custom_call.1} parent=1 // pred_check_branch
      %87 = sbr.rel (0) target = $region33
    $region32: #{tpu_custom_call.1} parent=1 // pred_region
      %s89 = ssub.s32 1024, 1024
      %90 = vsyncadd [#allocation12], %s89
      %s91 = sshll.u32 [#allocation13], 4
      %s92 = int_to_ptr.vmem [resolvable:$true] %s91
      %97 = dma.hbm_to_vmem [thread:$0]  %s7, 1024, %s92, [#allocation12], 128, 128, 8
    $region33: #{tpu_custom_call.1} parent=1 // pred_fallthru
      _
    // Predicated region
    $region34: #{tpu_custom_call.1} parent=1 // pred_check
      _
    $region35: #{tpu_custom_call.1} parent=1 // pred_check_branch
      %99 = sbr.rel (0) target = $region37
    $region36: #{tpu_custom_call.1} parent=1 // pred_region
      %s101 = ssub.s32 16, 16
      %102 = vsyncadd [#allocation15], %s101
      %s104 = sshll.u32 [#allocation14], 4
      %s105 = int_to_ptr.vmem [resolvable:$true] %s104
      %107 = dma.hbm_to_vmem [thread:$0]  %s8, 16, %s105, [#allocation15]
    $region37: #{tpu_custom_call.1} parent=1 // pred_fallthru
      _
    // Predicated region
    $region38: #{tpu_custom_call.1} parent=1 // pred_check
      _
    $region39: #{tpu_custom_call.1} parent=1 // pred_check_branch
      %109 = sbr.rel (0) target = $region41
    $region40: #{tpu_custom_call.1} parent=1 // pred_region
      %110 = dma.done [#allocation3], 1280
    $region41: #{tpu_custom_call.1} parent=1 // pred_fallthru
      _
    // Predicated region
    $region42: #{tpu_custom_call.1} parent=1 // pred_check
      _
    $region43: #{tpu_custom_call.1} parent=1 // pred_check_branch
      %112 = sbr.rel (0) target = $region45
    $region44: #{tpu_custom_call.1} parent=1 // pred_region
      %113 = dma.done [#allocation6], 40960
    $region45: #{tpu_custom_call.1} parent=1 // pred_fallthru
      _
    // Predicated region
    $region46: #{tpu_custom_call.1} parent=1 // pred_check
      _
    $region47: #{tpu_custom_call.1} parent=1 // pred_check_branch
      %115 = sbr.rel (0) target = $region49
    $region48: #{tpu_custom_call.1} parent=1 // pred_region
      %116 = dma.done [#allocation6], 32
    $region49: #{tpu_custom_call.1} parent=1 // pred_fallthru
      _
    // Predicated region
    $region50: #{tpu_custom_call.1} parent=1 // pred_check
      _
    $region51: #{tpu_custom_call.1} parent=1 // pred_check_branch
      %118 = sbr.rel (0) target = $region53
    $region52: #{tpu_custom_call.1} parent=1 // pred_region
      %119 = dma.done [#allocation9], 4096
    $region53: #{tpu_custom_call.1} parent=1 // pred_fallthru
      _
    // Predicated region
    $region54: #{tpu_custom_call.1} parent=1 // pred_check
      _
    $region55: #{tpu_custom_call.1} parent=1 // pred_check_branch
      %121 = sbr.rel (0) target = $region57
    $region56: #{tpu_custom_call.1} parent=1 // pred_region
      %122 = dma.done [#allocation9], 16
    $region57: #{tpu_custom_call.1} parent=1 // pred_fallthru
      _
    // Predicated region
    $region58: #{tpu_custom_call.1} parent=1 // pred_check
      _
    $region59: #{tpu_custom_call.1} parent=1 // pred_check_branch
      %124 = sbr.rel (0) target = $region61
    $region60: #{tpu_custom_call.1} parent=1 // pred_region
      %125 = dma.done [#allocation12], 16
    $region61: #{tpu_custom_call.1} parent=1 // pred_fallthru
      _
    // Predicated region
    $region62: #{tpu_custom_call.1} parent=1 // pred_check
      _
    $region63: #{tpu_custom_call.1} parent=1 // pred_check_branch
      %127 = sbr.rel (0) target = $region65
    $region64: #{tpu_custom_call.1} parent=1 // pred_region
      %128 = dma.done [#allocation12], 1024
    $region65: #{tpu_custom_call.1} parent=1 // pred_fallthru
      _
    // Predicated region
    $region66: #{tpu_custom_call.1} parent=1 // pred_check
      _
    $region67: #{tpu_custom_call.1} parent=1 // pred_check_branch
      %130 = sbr.rel (0) target = $region69
    $region68: #{tpu_custom_call.1} parent=1 // pred_region
      %131 = dma.done [#allocation15], 16
    $region69: #{tpu_custom_call.1} parent=1 // pred_fallthru
      _
    %v132 = vld [vmem:[#allocation2] sm:$0xff]
    %v133 = vld [vmem:[#allocation2 + $0x8] sm:$0xff]
    %v134 = vld [vmem:[#allocation2 + $0x10] sm:$0xff]
    %v135 = vld [vmem:[#allocation2 + $0x18] sm:$0xff]
    %v136 = vld [vmem:[#allocation2 + $0x20] sm:$0xff]
    %v137 = vld [vmem:[#allocation2 + $0x28] sm:$0xff]
    %v138 = vld [vmem:[#allocation2 + $0x30] sm:$0xff]
    %v139 = vld [vmem:[#allocation2 + $0x38] sm:$0xff]
    %v140 = vld [vmem:[#allocation2 + $0x40] sm:$0xff]
    %v141 = vld [vmem:[#allocation2 + $0x48] sm:$0xff]
    %v142 = vld [vmem:[#allocation5] sm:$0xff]
    %v143 = vld [vmem:[#allocation5 + $0x8] sm:$0xff]
    %v144 = vld [vmem:[#allocation5 + $0x10] sm:$0xff]
    %v145 = vld [vmem:[#allocation5 + $0x18] sm:$0xff]
    %v146 = vld [vmem:[#allocation5 + $0x20] sm:$0xff]
    %v147 = vld [vmem:[#allocation5 + $0x28] sm:$0xff]
    %v148 = vld [vmem:[#allocation5 + $0x30] sm:$0xff]
    %v149 = vld [vmem:[#allocation5 + $0x38] sm:$0xff]
    %v150 = vld [vmem:[#allocation5 + $0x40] sm:$0xff]
    %v151 = vld [vmem:[#allocation5 + $0x48] sm:$0xff]
    %v152 = vld [vmem:[#allocation5 + $0x50] sm:$0xff]
    %v153 = vld [vmem:[#allocation5 + $0x58] sm:$0xff]
    %v154 = vld [vmem:[#allocation5 + $0x60] sm:$0xff]
    %v155 = vld [vmem:[#allocation5 + $0x68] sm:$0xff]
    %v156 = vld [vmem:[#allocation5 + $0x70] sm:$0xff]
    %v157 = vld [vmem:[#allocation5 + $0x78] sm:$0xff]
    %v158 = vld [vmem:[#allocation5 + $0x80] sm:$0xff]
    %v159 = vld [vmem:[#allocation5 + $0x88] sm:$0xff]
    %v160 = vld [vmem:[#allocation5 + $0x90] sm:$0xff]
    %v161 = vld [vmem:[#allocation5 + $0x98] sm:$0xff]
    %v162 = vld [vmem:[#allocation5 + $0xa0] sm:$0xff]
    %v163 = vld [vmem:[#allocation5 + $0xa8] sm:$0xff]
    %v164 = vld [vmem:[#allocation5 + $0xb0] sm:$0xff]
    %v165 = vld [vmem:[#allocation5 + $0xb8] sm:$0xff]
    %v166 = vld [vmem:[#allocation5 + $0xc0] sm:$0xff]
    %v167 = vld [vmem:[#allocation5 + $0xc8] sm:$0xff]
    %v168 = vld [vmem:[#allocation5 + $0xd0] sm:$0xff]
    %v169 = vld [vmem:[#allocation5 + $0xd8] sm:$0xff]
    %v170 = vld [vmem:[#allocation5 + $0xe0] sm:$0xff]
    %v171 = vld [vmem:[#allocation5 + $0xe8] sm:$0xff]
    %v172 = vld [vmem:[#allocation5 + $0xf0] sm:$0xff]
    %v173 = vld [vmem:[#allocation5 + $0xf8] sm:$0xff]
    %v174 = vld [vmem:[#allocation5 + $0x100] sm:$0xff]
    %v175 = vld [vmem:[#allocation5 + $0x108] sm:$0xff]
    %v176 = vld [vmem:[#allocation5 + $0x110] sm:$0xff]
    %v177 = vld [vmem:[#allocation5 + $0x118] sm:$0xff]
    %v178 = vld [vmem:[#allocation5 + $0x120] sm:$0xff]
    %v179 = vld [vmem:[#allocation5 + $0x128] sm:$0xff]
    %v180 = vld [vmem:[#allocation5 + $0x130] sm:$0xff]
    %v181 = vld [vmem:[#allocation5 + $0x138] sm:$0xff]
    %v182 = vld [vmem:[#allocation5 + $0x140] sm:$0xff]
    %v183 = vld [vmem:[#allocation5 + $0x148] sm:$0xff]
    %v184 = vld [vmem:[#allocation5 + $0x150] sm:$0xff]
    %v185 = vld [vmem:[#allocation5 + $0x158] sm:$0xff]
    %v186 = vld [vmem:[#allocation5 + $0x160] sm:$0xff]
    %v187 = vld [vmem:[#allocation5 + $0x168] sm:$0xff]
    %v188 = vld [vmem:[#allocation5 + $0x170] sm:$0xff]
    %v189 = vld [vmem:[#allocation5 + $0x178] sm:$0xff]
    %v190 = vld [vmem:[#allocation5 + $0x180] sm:$0xff]
    %v191 = vld [vmem:[#allocation5 + $0x188] sm:$0xff]
    %v192 = vld [vmem:[#allocation5 + $0x190] sm:$0xff]
    %v193 = vld [vmem:[#allocation5 + $0x198] sm:$0xff]
    %v194 = vld [vmem:[#allocation5 + $0x1a0] sm:$0xff]
    %v195 = vld [vmem:[#allocation5 + $0x1a8] sm:$0xff]
    %v196 = vld [vmem:[#allocation5 + $0x1b0] sm:$0xff]
    %v197 = vld [vmem:[#allocation5 + $0x1b8] sm:$0xff]
    %v198 = vld [vmem:[#allocation5 + $0x1c0] sm:$0xff]
    %v199 = vld [vmem:[#allocation5 + $0x1c8] sm:$0xff]
    %v200 = vld [vmem:[#allocation5 + $0x1d0] sm:$0xff]
    %v201 = vld [vmem:[#allocation5 + $0x1d8] sm:$0xff]
    %v202 = vld [vmem:[#allocation5 + $0x1e0] sm:$0xff]
    %v203 = vld [vmem:[#allocation5 + $0x1e8] sm:$0xff]
    %v204 = vld [vmem:[#allocation5 + $0x1f0] sm:$0xff]
    %v205 = vld [vmem:[#allocation5 + $0x1f8] sm:$0xff]
    %v206 = vld [vmem:[#allocation5 + $0x200] sm:$0xff]
    %v207 = vld [vmem:[#allocation5 + $0x208] sm:$0xff]
    %v208 = vld [vmem:[#allocation5 + $0x210] sm:$0xff]
    %v209 = vld [vmem:[#allocation5 + $0x218] sm:$0xff]
    %v210 = vld [vmem:[#allocation5 + $0x220] sm:$0xff]
    %v211 = vld [vmem:[#allocation5 + $0x228] sm:$0xff]
    %v212 = vld [vmem:[#allocation5 + $0x230] sm:$0xff]
    %v213 = vld [vmem:[#allocation5 + $0x238] sm:$0xff]
    %v214 = vld [vmem:[#allocation5 + $0x240] sm:$0xff]
    %v215 = vld [vmem:[#allocation5 + $0x248] sm:$0xff]
    %v216 = vld [vmem:[#allocation5 + $0x250] sm:$0xff]
    %v217 = vld [vmem:[#allocation5 + $0x258] sm:$0xff]
    %v218 = vld [vmem:[#allocation5 + $0x260] sm:$0xff]
    %v219 = vld [vmem:[#allocation5 + $0x268] sm:$0xff]
    %v220 = vld [vmem:[#allocation5 + $0x270] sm:$0xff]
    %v221 = vld [vmem:[#allocation5 + $0x278] sm:$0xff]
    %v222 = vld [vmem:[#allocation5 + $0x280] sm:$0xff]
    %v223 = vld [vmem:[#allocation5 + $0x288] sm:$0xff]
    %v224 = vld [vmem:[#allocation5 + $0x290] sm:$0xff]
    %v225 = vld [vmem:[#allocation5 + $0x298] sm:$0xff]
    %v226 = vld [vmem:[#allocation5 + $0x2a0] sm:$0xff]
    %v227 = vld [vmem:[#allocation5 + $0x2a8] sm:$0xff]
    %v228 = vld [vmem:[#allocation5 + $0x2b0] sm:$0xff]
    %v229 = vld [vmem:[#allocation5 + $0x2b8] sm:$0xff]
    %v230 = vld [vmem:[#allocation5 + $0x2c0] sm:$0xff]
    %v231 = vld [vmem:[#allocation5 + $0x2c8] sm:$0xff]
    %v232 = vld [vmem:[#allocation5 + $0x2d0] sm:$0xff]
    %v233 = vld [vmem:[#allocation5 + $0x2d8] sm:$0xff]
    %v234 = vld [vmem:[#allocation5 + $0x2e0] sm:$0xff]
    %v235 = vld [vmem:[#allocation5 + $0x2e8] sm:$0xff]
    %v236 = vld [vmem:[#allocation5 + $0x2f0] sm:$0xff]
    %v237 = vld [vmem:[#allocation5 + $0x2f8] sm:$0xff]
    %v238 = vld [vmem:[#allocation5 + $0x300] sm:$0xff]
    %v239 = vld [vmem:[#allocation5 + $0x308] sm:$0xff]
    %v240 = vld [vmem:[#allocation5 + $0x310] sm:$0xff]
    %v241 = vld [vmem:[#allocation5 + $0x318] sm:$0xff]
    %v242 = vld [vmem:[#allocation5 + $0x320] sm:$0xff]
    %v243 = vld [vmem:[#allocation5 + $0x328] sm:$0xff]
    %v244 = vld [vmem:[#allocation5 + $0x330] sm:$0xff]
    %v245 = vld [vmem:[#allocation5 + $0x338] sm:$0xff]
    %v246 = vld [vmem:[#allocation5 + $0x340] sm:$0xff]
    %v247 = vld [vmem:[#allocation5 + $0x348] sm:$0xff]
    %v248 = vld [vmem:[#allocation5 + $0x350] sm:$0xff]
    %v249 = vld [vmem:[#allocation5 + $0x358] sm:$0xff]
    %v250 = vld [vmem:[#allocation5 + $0x360] sm:$0xff]
    %v251 = vld [vmem:[#allocation5 + $0x368] sm:$0xff]
    %v252 = vld [vmem:[#allocation5 + $0x370] sm:$0xff]
    %v253 = vld [vmem:[#allocation5 + $0x378] sm:$0xff]
    %v254 = vld [vmem:[#allocation5 + $0x380] sm:$0xff]
    %v255 = vld [vmem:[#allocation5 + $0x388] sm:$0xff]
    %v256 = vld [vmem:[#allocation5 + $0x390] sm:$0xff]
    %v257 = vld [vmem:[#allocation5 + $0x398] sm:$0xff]
    %v258 = vld [vmem:[#allocation5 + $0x3a0] sm:$0xff]
    %v259 = vld [vmem:[#allocation5 + $0x3a8] sm:$0xff]
    %v260 = vld [vmem:[#allocation5 + $0x3b0] sm:$0xff]
    %v261 = vld [vmem:[#allocation5 + $0x3b8] sm:$0xff]
    %v262 = vld [vmem:[#allocation5 + $0x3c0] sm:$0xff]
    %v263 = vld [vmem:[#allocation5 + $0x3c8] sm:$0xff]
    %v264 = vld [vmem:[#allocation5 + $0x3d0] sm:$0xff]
    %v265 = vld [vmem:[#allocation5 + $0x3d8] sm:$0xff]
    %v266 = vld [vmem:[#allocation5 + $0x3e0] sm:$0xff]
    %v267 = vld [vmem:[#allocation5 + $0x3e8] sm:$0xff]
    %v268 = vld [vmem:[#allocation5 + $0x3f0] sm:$0xff]
    %v269 = vld [vmem:[#allocation5 + $0x3f8] sm:$0xff]
    %v270 = vld [vmem:[#allocation5 + $0x400] sm:$0xff]
    %v271 = vld [vmem:[#allocation5 + $0x408] sm:$0xff]
    %v272 = vld [vmem:[#allocation5 + $0x410] sm:$0xff]
    %v273 = vld [vmem:[#allocation5 + $0x418] sm:$0xff]
    %v274 = vld [vmem:[#allocation5 + $0x420] sm:$0xff]
    %v275 = vld [vmem:[#allocation5 + $0x428] sm:$0xff]
    %v276 = vld [vmem:[#allocation5 + $0x430] sm:$0xff]
    %v277 = vld [vmem:[#allocation5 + $0x438] sm:$0xff]
    %v278 = vld [vmem:[#allocation5 + $0x440] sm:$0xff]
    %v279 = vld [vmem:[#allocation5 + $0x448] sm:$0xff]
    %v280 = vld [vmem:[#allocation5 + $0x450] sm:$0xff]
    %v281 = vld [vmem:[#allocation5 + $0x458] sm:$0xff]
    %v282 = vld [vmem:[#allocation5 + $0x460] sm:$0xff]
    %v283 = vld [vmem:[#allocation5 + $0x468] sm:$0xff]
    %v284 = vld [vmem:[#allocation5 + $0x470] sm:$0xff]
    %v285 = vld [vmem:[#allocation5 + $0x478] sm:$0xff]
    %v286 = vld [vmem:[#allocation5 + $0x480] sm:$0xff]
    %v287 = vld [vmem:[#allocation5 + $0x488] sm:$0xff]
    %v288 = vld [vmem:[#allocation5 + $0x490] sm:$0xff]
    %v289 = vld [vmem:[#allocation5 + $0x498] sm:$0xff]
    %v290 = vld [vmem:[#allocation5 + $0x4a0] sm:$0xff]
    %v291 = vld [vmem:[#allocation5 + $0x4a8] sm:$0xff]
    %v292 = vld [vmem:[#allocation5 + $0x4b0] sm:$0xff]
    %v293 = vld [vmem:[#allocation5 + $0x4b8] sm:$0xff]
    %v294 = vld [vmem:[#allocation5 + $0x4c0] sm:$0xff]
    %v295 = vld [vmem:[#allocation5 + $0x4c8] sm:$0xff]
    %v296 = vld [vmem:[#allocation5 + $0x4d0] sm:$0xff]
    %v297 = vld [vmem:[#allocation5 + $0x4d8] sm:$0xff]
    %v298 = vld [vmem:[#allocation5 + $0x4e0] sm:$0xff]
    %v299 = vld [vmem:[#allocation5 + $0x4e8] sm:$0xff]
    %v300 = vld [vmem:[#allocation5 + $0x4f0] sm:$0xff]
    %v301 = vld [vmem:[#allocation5 + $0x4f8] sm:$0xff]
    %v302 = vld [vmem:[#allocation5 + $0x500] sm:$0xff]
    %v303 = vld [vmem:[#allocation5 + $0x508] sm:$0xff]
    %v304 = vld [vmem:[#allocation5 + $0x510] sm:$0xff]
    %v305 = vld [vmem:[#allocation5 + $0x518] sm:$0xff]
    %v306 = vld [vmem:[#allocation5 + $0x520] sm:$0xff]
    %v307 = vld [vmem:[#allocation5 + $0x528] sm:$0xff]
    %v308 = vld [vmem:[#allocation5 + $0x530] sm:$0xff]
    %v309 = vld [vmem:[#allocation5 + $0x538] sm:$0xff]
    %v310 = vld [vmem:[#allocation5 + $0x540] sm:$0xff]
    %v311 = vld [vmem:[#allocation5 + $0x548] sm:$0xff]
    %v312 = vld [vmem:[#allocation5 + $0x550] sm:$0xff]
    %v313 = vld [vmem:[#allocation5 + $0x558] sm:$0xff]
    %v314 = vld [vmem:[#allocation5 + $0x560] sm:$0xff]
    %v315 = vld [vmem:[#allocation5 + $0x568] sm:$0xff]
    %v316 = vld [vmem:[#allocation5 + $0x570] sm:$0xff]
    %v317 = vld [vmem:[#allocation5 + $0x578] sm:$0xff]
    %v318 = vld [vmem:[#allocation5 + $0x580] sm:$0xff]
    %v319 = vld [vmem:[#allocation5 + $0x588] sm:$0xff]
    %v320 = vld [vmem:[#allocation5 + $0x590] sm:$0xff]
    %v321 = vld [vmem:[#allocation5 + $0x598] sm:$0xff]
    %v322 = vld [vmem:[#allocation5 + $0x5a0] sm:$0xff]
    %v323 = vld [vmem:[#allocation5 + $0x5a8] sm:$0xff]
    %v324 = vld [vmem:[#allocation5 + $0x5b0] sm:$0xff]
    %v325 = vld [vmem:[#allocation5 + $0x5b8] sm:$0xff]
    %v326 = vld [vmem:[#allocation5 + $0x5c0] sm:$0xff]
    %v327 = vld [vmem:[#allocation5 + $0x5c8] sm:$0xff]
    %v328 = vld [vmem:[#allocation5 + $0x5d0] sm:$0xff]
    %v329 = vld [vmem:[#allocation5 + $0x5d8] sm:$0xff]
    %v330 = vld [vmem:[#allocation5 + $0x5e0] sm:$0xff]
    %v331 = vld [vmem:[#allocation5 + $0x5e8] sm:$0xff]
    %v332 = vld [vmem:[#allocation5 + $0x5f0] sm:$0xff]
    %v333 = vld [vmem:[#allocation5 + $0x5f8] sm:$0xff]
    %v334 = vld [vmem:[#allocation5 + $0x600] sm:$0xff]
    %v335 = vld [vmem:[#allocation5 + $0x608] sm:$0xff]
    %v336 = vld [vmem:[#allocation5 + $0x610] sm:$0xff]
    %v337 = vld [vmem:[#allocation5 + $0x618] sm:$0xff]
    %v338 = vld [vmem:[#allocation5 + $0x620] sm:$0xff]
    %v339 = vld [vmem:[#allocation5 + $0x628] sm:$0xff]
    %v340 = vld [vmem:[#allocation5 + $0x630] sm:$0xff]
    %v341 = vld [vmem:[#allocation5 + $0x638] sm:$0xff]
    %v342 = vld [vmem:[#allocation5 + $0x640] sm:$0xff]
    %v343 = vld [vmem:[#allocation5 + $0x648] sm:$0xff]
    %v344 = vld [vmem:[#allocation5 + $0x650] sm:$0xff]
    %v345 = vld [vmem:[#allocation5 + $0x658] sm:$0xff]
    %v346 = vld [vmem:[#allocation5 + $0x660] sm:$0xff]
    %v347 = vld [vmem:[#allocation5 + $0x668] sm:$0xff]
    %v348 = vld [vmem:[#allocation5 + $0x670] sm:$0xff]
    %v349 = vld [vmem:[#allocation5 + $0x678] sm:$0xff]
    %v350 = vld [vmem:[#allocation5 + $0x680] sm:$0xff]
    %v351 = vld [vmem:[#allocation5 + $0x688] sm:$0xff]
    %v352 = vld [vmem:[#allocation5 + $0x690] sm:$0xff]
    %v353 = vld [vmem:[#allocation5 + $0x698] sm:$0xff]
    %v354 = vld [vmem:[#allocation5 + $0x6a0] sm:$0xff]
    %v355 = vld [vmem:[#allocation5 + $0x6a8] sm:$0xff]
    %v356 = vld [vmem:[#allocation5 + $0x6b0] sm:$0xff]
    %v357 = vld [vmem:[#allocation5 + $0x6b8] sm:$0xff]
    %v358 = vld [vmem:[#allocation5 + $0x6c0] sm:$0xff]
    %v359 = vld [vmem:[#allocation5 + $0x6c8] sm:$0xff]
    %v360 = vld [vmem:[#allocation5 + $0x6d0] sm:$0xff]
    %v361 = vld [vmem:[#allocation5 + $0x6d8] sm:$0xff]
    %v362 = vld [vmem:[#allocation5 + $0x6e0] sm:$0xff]
    %v363 = vld [vmem:[#allocation5 + $0x6e8] sm:$0xff]
    %v364 = vld [vmem:[#allocation5 + $0x6f0] sm:$0xff]
    %v365 = vld [vmem:[#allocation5 + $0x6f8] sm:$0xff]
    %v366 = vld [vmem:[#allocation5 + $0x700] sm:$0xff]
    %v367 = vld [vmem:[#allocation5 + $0x708] sm:$0xff]
    %v368 = vld [vmem:[#allocation5 + $0x710] sm:$0xff]
    %v369 = vld [vmem:[#allocation5 + $0x718] sm:$0xff]
    %v370 = vld [vmem:[#allocation5 + $0x720] sm:$0xff]
    %v371 = vld [vmem:[#allocation5 + $0x728] sm:$0xff]
    %v372 = vld [vmem:[#allocation5 + $0x730] sm:$0xff]
    %v373 = vld [vmem:[#allocation5 + $0x738] sm:$0xff]
    %v374 = vld [vmem:[#allocation5 + $0x740] sm:$0xff]
    %v375 = vld [vmem:[#allocation5 + $0x748] sm:$0xff]
    %v376 = vld [vmem:[#allocation5 + $0x750] sm:$0xff]
    %v377 = vld [vmem:[#allocation5 + $0x758] sm:$0xff]
    %v378 = vld [vmem:[#allocation5 + $0x760] sm:$0xff]
    %v379 = vld [vmem:[#allocation5 + $0x768] sm:$0xff]
    %v380 = vld [vmem:[#allocation5 + $0x770] sm:$0xff]
    %v381 = vld [vmem:[#allocation5 + $0x778] sm:$0xff]
    %v382 = vld [vmem:[#allocation5 + $0x780] sm:$0xff]
    %v383 = vld [vmem:[#allocation5 + $0x788] sm:$0xff]
    %v384 = vld [vmem:[#allocation5 + $0x790] sm:$0xff]
    %v385 = vld [vmem:[#allocation5 + $0x798] sm:$0xff]
    %v386 = vld [vmem:[#allocation5 + $0x7a0] sm:$0xff]
    %v387 = vld [vmem:[#allocation5 + $0x7a8] sm:$0xff]
    %v388 = vld [vmem:[#allocation5 + $0x7b0] sm:$0xff]
    %v389 = vld [vmem:[#allocation5 + $0x7b8] sm:$0xff]
    %v390 = vld [vmem:[#allocation5 + $0x7c0] sm:$0xff]
    %v391 = vld [vmem:[#allocation5 + $0x7c8] sm:$0xff]
    %v392 = vld [vmem:[#allocation5 + $0x7d0] sm:$0xff]
    %v393 = vld [vmem:[#allocation5 + $0x7d8] sm:$0xff]
    %v394 = vld [vmem:[#allocation5 + $0x7e0] sm:$0xff]
    %v395 = vld [vmem:[#allocation5 + $0x7e8] sm:$0xff]
    %v396 = vld [vmem:[#allocation5 + $0x7f0] sm:$0xff]
    %v397 = vld [vmem:[#allocation5 + $0x7f8] sm:$0xff]
    %v398 = vld [vmem:[#allocation5 + $0x800] sm:$0xff]
    %v399 = vld [vmem:[#allocation5 + $0x808] sm:$0xff]
    %v400 = vld [vmem:[#allocation5 + $0x810] sm:$0xff]
    %v401 = vld [vmem:[#allocation5 + $0x818] sm:$0xff]
    %v402 = vld [vmem:[#allocation5 + $0x820] sm:$0xff]
    %v403 = vld [vmem:[#allocation5 + $0x828] sm:$0xff]
    %v404 = vld [vmem:[#allocation5 + $0x830] sm:$0xff]
    %v405 = vld [vmem:[#allocation5 + $0x838] sm:$0xff]
    %v406 = vld [vmem:[#allocation5 + $0x840] sm:$0xff]
    %v407 = vld [vmem:[#allocation5 + $0x848] sm:$0xff]
    %v408 = vld [vmem:[#allocation5 + $0x850] sm:$0xff]
    %v409 = vld [vmem:[#allocation5 + $0x858] sm:$0xff]
    %v410 = vld [vmem:[#allocation5 + $0x860] sm:$0xff]
    %v411 = vld [vmem:[#allocation5 + $0x868] sm:$0xff]
    %v412 = vld [vmem:[#allocation5 + $0x870] sm:$0xff]
    %v413 = vld [vmem:[#allocation5 + $0x878] sm:$0xff]
    %v414 = vld [vmem:[#allocation5 + $0x880] sm:$0xff]
    %v415 = vld [vmem:[#allocation5 + $0x888] sm:$0xff]
    %v416 = vld [vmem:[#allocation5 + $0x890] sm:$0xff]
    %v417 = vld [vmem:[#allocation5 + $0x898] sm:$0xff]
    %v418 = vld [vmem:[#allocation5 + $0x8a0] sm:$0xff]
    %v419 = vld [vmem:[#allocation5 + $0x8a8] sm:$0xff]
    %v420 = vld [vmem:[#allocation5 + $0x8b0] sm:$0xff]
    %v421 = vld [vmem:[#allocation5 + $0x8b8] sm:$0xff]
    %v422 = vld [vmem:[#allocation5 + $0x8c0] sm:$0xff]
    %v423 = vld [vmem:[#allocation5 + $0x8c8] sm:$0xff]
    %v424 = vld [vmem:[#allocation5 + $0x8d0] sm:$0xff]
    %v425 = vld [vmem:[#allocation5 + $0x8d8] sm:$0xff]
    %v426 = vld [vmem:[#allocation5 + $0x8e0] sm:$0xff]
    %v427 = vld [vmem:[#allocation5 + $0x8e8] sm:$0xff]
    %v428 = vld [vmem:[#allocation5 + $0x8f0] sm:$0xff]
    %v429 = vld [vmem:[#allocation5 + $0x8f8] sm:$0xff]
    %v430 = vld [vmem:[#allocation5 + $0x900] sm:$0xff]
    %v431 = vld [vmem:[#allocation5 + $0x908] sm:$0xff]
    %v432 = vld [vmem:[#allocation5 + $0x910] sm:$0xff]
    %v433 = vld [vmem:[#allocation5 + $0x918] sm:$0xff]
    %v434 = vld [vmem:[#allocation5 + $0x920] sm:$0xff]
    %v435 = vld [vmem:[#allocation5 + $0x928] sm:$0xff]
    %v436 = vld [vmem:[#allocation5 + $0x930] sm:$0xff]
    %v437 = vld [vmem:[#allocation5 + $0x938] sm:$0xff]
    %v438 = vld [vmem:[#allocation5 + $0x940] sm:$0xff]
    %v439 = vld [vmem:[#allocation5 + $0x948] sm:$0xff]
    %v440 = vld [vmem:[#allocation5 + $0x950] sm:$0xff]
    %v441 = vld [vmem:[#allocation5 + $0x958] sm:$0xff]
    %v442 = vld [vmem:[#allocation5 + $0x960] sm:$0xff]
    %v443 = vld [vmem:[#allocation5 + $0x968] sm:$0xff]
    %v444 = vld [vmem:[#allocation5 + $0x970] sm:$0xff]
    %v445 = vld [vmem:[#allocation5 + $0x978] sm:$0xff]
    %v446 = vld [vmem:[#allocation5 + $0x980] sm:$0xff]
    %v447 = vld [vmem:[#allocation5 + $0x988] sm:$0xff]
    %v448 = vld [vmem:[#allocation5 + $0x990] sm:$0xff]
    %v449 = vld [vmem:[#allocation5 + $0x998] sm:$0xff]
    %v450 = vld [vmem:[#allocation5 + $0x9a0] sm:$0xff]
    %v451 = vld [vmem:[#allocation5 + $0x9a8] sm:$0xff]
    %v452 = vld [vmem:[#allocation5 + $0x9b0] sm:$0xff]
    %v453 = vld [vmem:[#allocation5 + $0x9b8] sm:$0xff]
    %v454 = vld [vmem:[#allocation5 + $0x9c0] sm:$0xff]
    %v455 = vld [vmem:[#allocation5 + $0x9c8] sm:$0xff]
    %v456 = vld [vmem:[#allocation5 + $0x9d0] sm:$0xff]
    %v457 = vld [vmem:[#allocation5 + $0x9d8] sm:$0xff]
    %v458 = vld [vmem:[#allocation5 + $0x9e0] sm:$0xff]
    %v459 = vld [vmem:[#allocation5 + $0x9e8] sm:$0xff]
    %v460 = vld [vmem:[#allocation5 + $0x9f0] sm:$0xff]
    %v461 = vld [vmem:[#allocation5 + $0x9f8] sm:$0xff]
    %v462 = vld [vmem:[#allocation7] sm:$0x3]
    %v464 = vlaneseq
    %v465 = vshrl.u32 %v464, 7
    %v466 = vsub.s32 0, %v465
    %v467 = vrot.slane %v462, %v466
    %v468 = vlaneseq
    %v469 = vshrl.u32 %v468, 7
    %v470 = vsub.s32 1, %v469
    %v471 = vrot.slane %v462, %v470
    %v484 = vunpack.c.l.b16 %v132
    %v485 = vunpack.c.h.b16 %v132
    %v486 = vunpack.c.l.b16 %v133
    %v487 = vunpack.c.h.b16 %v133
    %v488 = vunpack.c.l.b16 %v134
    %v489 = vunpack.c.h.b16 %v134
    %v490 = vunpack.c.l.b16 %v135
    %v491 = vunpack.c.h.b16 %v135
    %v492 = vunpack.c.l.b16 %v136
    %v493 = vunpack.c.h.b16 %v136
    %v494 = vunpack.c.l.b16 %v137
    %v495 = vunpack.c.h.b16 %v137
    %v496 = vunpack.c.l.b16 %v138
    %v497 = vunpack.c.h.b16 %v138
    %v498 = vunpack.c.l.b16 %v139
    %v499 = vunpack.c.h.b16 %v139
    %v500 = vunpack.c.l.b16 %v140
    %v501 = vunpack.c.h.b16 %v140
    %v502 = vunpack.c.l.b16 %v141
    %v503 = vunpack.c.h.b16 %v141
    %v504 = vpack.c.b16 %v484, %v484
    %v505 = vpack.c.b16 %v485, %v485
    %v506 = vpack.c.b16 %v486, %v486
    %v507 = vpack.c.b16 %v487, %v487
    %v508 = vpack.c.b16 %v488, %v488
    %v509 = vpack.c.b16 %v489, %v489
    %v510 = vpack.c.b16 %v490, %v490
    %v511 = vpack.c.b16 %v491, %v491
    %v512 = vpack.c.b16 %v492, %v492
    %v513 = vpack.c.b16 %v493, %v493
    %v514 = vpack.c.b16 %v494, %v494
    %v515 = vpack.c.b16 %v495, %v495
    %v516 = vpack.c.b16 %v496, %v496
    %v517 = vpack.c.b16 %v497, %v497
    %v518 = vpack.c.b16 %v498, %v498
    %v519 = vpack.c.b16 %v499, %v499
    %v520 = vpack.c.b16 %v500, %v500
    %v521 = vpack.c.b16 %v501, %v501
    %v522 = vpack.c.b16 %v502, %v502
    %v523 = vpack.c.b16 %v503, %v503
    %v864 = vunpack.c.l.b16 %v142
    %v865 = vunpack.c.h.b16 %v142
    %v866 = vunpack.c.l.b16 %v143
    %v867 = vunpack.c.h.b16 %v143
    %v868 = vunpack.c.l.b16 %v144
    %v869 = vunpack.c.h.b16 %v144
    %v870 = vunpack.c.l.b16 %v145
    %v871 = vunpack.c.h.b16 %v145
    %v872 = vunpack.c.l.b16 %v146
    %v873 = vunpack.c.h.b16 %v146
    %v874 = vunpack.c.l.b16 %v147
    %v875 = vunpack.c.h.b16 %v147
    %v876 = vunpack.c.l.b16 %v148
    %v877 = vunpack.c.h.b16 %v148
    %v878 = vunpack.c.l.b16 %v149
    %v879 = vunpack.c.h.b16 %v149
    %v880 = vunpack.c.l.b16 %v150
    %v881 = vunpack.c.h.b16 %v150
    %v882 = vunpack.c.l.b16 %v151
    %v883 = vunpack.c.h.b16 %v151
    %v884 = vunpack.c.l.b16 %v152
    %v885 = vunpack.c.h.b16 %v152
    %v886 = vunpack.c.l.b16 %v153
    %v887 = vunpack.c.h.b16 %v153
    %v888 = vunpack.c.l.b16 %v154
    %v889 = vunpack.c.h.b16 %v154
    %v890 = vunpack.c.l.b16 %v155
    %v891 = vunpack.c.h.b16 %v155
    %v892 = vunpack.c.l.b16 %v156
    %v893 = vunpack.c.h.b16 %v156
    %v894 = vunpack.c.l.b16 %v157
    %v895 = vunpack.c.h.b16 %v157
    %v896 = vunpack.c.l.b16 %v158
    %v897 = vunpack.c.h.b16 %v158
    %v898 = vunpack.c.l.b16 %v159
    %v899 = vunpack.c.h.b16 %v159
    %v900 = vunpack.c.l.b16 %v160
    %v901 = vunpack.c.h.b16 %v160
    %v902 = vunpack.c.l.b16 %v161
    %v903 = vunpack.c.h.b16 %v161
    %v904 = vunpack.c.l.b16 %v162
    %v905 = vunpack.c.h.b16 %v162
    %v906 = vunpack.c.l.b16 %v163
    %v907 = vunpack.c.h.b16 %v163
    %v908 = vunpack.c.l.b16 %v164
    %v909 = vunpack.c.h.b16 %v164
    %v910 = vunpack.c.l.b16 %v165
    %v911 = vunpack.c.h.b16 %v165
    %v912 = vunpack.c.l.b16 %v166
    %v913 = vunpack.c.h.b16 %v166
    %v914 = vunpack.c.l.b16 %v167
    %v915 = vunpack.c.h.b16 %v167
    %v916 = vunpack.c.l.b16 %v168
    %v917 = vunpack.c.h.b16 %v168
    %v918 = vunpack.c.l.b16 %v169
    %v919 = vunpack.c.h.b16 %v169
    %v920 = vunpack.c.l.b16 %v170
    %v921 = vunpack.c.h.b16 %v170
    %v922 = vunpack.c.l.b16 %v171
    %v923 = vunpack.c.h.b16 %v171
    %v924 = vunpack.c.l.b16 %v172
    %v925 = vunpack.c.h.b16 %v172
    %v926 = vunpack.c.l.b16 %v173
    %v927 = vunpack.c.h.b16 %v173
    %v928 = vunpack.c.l.b16 %v174
    %v929 = vunpack.c.h.b16 %v174
    %v930 = vunpack.c.l.b16 %v175
    %v931 = vunpack.c.h.b16 %v175
    %v932 = vunpack.c.l.b16 %v176
    %v933 = vunpack.c.h.b16 %v176
    %v934 = vunpack.c.l.b16 %v177
    %v935 = vunpack.c.h.b16 %v177
    %v936 = vunpack.c.l.b16 %v178
    %v937 = vunpack.c.h.b16 %v178
    %v938 = vunpack.c.l.b16 %v179
    %v939 = vunpack.c.h.b16 %v179
    %v940 = vunpack.c.l.b16 %v180
    %v941 = vunpack.c.h.b16 %v180
    %v942 = vunpack.c.l.b16 %v181
    %v943 = vunpack.c.h.b16 %v181
    %v944 = vunpack.c.l.b16 %v182
    %v945 = vunpack.c.h.b16 %v182
    %v946 = vunpack.c.l.b16 %v183
    %v947 = vunpack.c.h.b16 %v183
    %v948 = vunpack.c.l.b16 %v184
    %v949 = vunpack.c.h.b16 %v184
    %v950 = vunpack.c.l.b16 %v185
    %v951 = vunpack.c.h.b16 %v185
    %v952 = vunpack.c.l.b16 %v186
    %v953 = vunpack.c.h.b16 %v186
    %v954 = vunpack.c.l.b16 %v187
    %v955 = vunpack.c.h.b16 %v187
    %v956 = vunpack.c.l.b16 %v188
    %v957 = vunpack.c.h.b16 %v188
    %v958 = vunpack.c.l.b16 %v189
    %v959 = vunpack.c.h.b16 %v189
    %v960 = vunpack.c.l.b16 %v190
    %v961 = vunpack.c.h.b16 %v190
    %v962 = vunpack.c.l.b16 %v191
    %v963 = vunpack.c.h.b16 %v191
    %v964 = vunpack.c.l.b16 %v192
    %v965 = vunpack.c.h.b16 %v192
    %v966 = vunpack.c.l.b16 %v193
    %v967 = vunpack.c.h.b16 %v193
    %v968 = vunpack.c.l.b16 %v194
    %v969 = vunpack.c.h.b16 %v194
    %v970 = vunpack.c.l.b16 %v195
    %v971 = vunpack.c.h.b16 %v195
    %v972 = vunpack.c.l.b16 %v196
    %v973 = vunpack.c.h.b16 %v196
    %v974 = vunpack.c.l.b16 %v197
    %v975 = vunpack.c.h.b16 %v197
    %v976 = vunpack.c.l.b16 %v198
    %v977 = vunpack.c.h.b16 %v198
    %v978 = vunpack.c.l.b16 %v199
    %v979 = vunpack.c.h.b16 %v199
    %v980 = vunpack.c.l.b16 %v200
    %v981 = vunpack.c.h.b16 %v200
    %v982 = vunpack.c.l.b16 %v201
    %v983 = vunpack.c.h.b16 %v201
    %v984 = vunpack.c.l.b16 %v202
    %v985 = vunpack.c.h.b16 %v202
    %v986 = vunpack.c.l.b16 %v203
    %v987 = vunpack.c.h.b16 %v203
    %v988 = vunpack.c.l.b16 %v204
    %v989 = vunpack.c.h.b16 %v204
    %v990 = vunpack.c.l.b16 %v205
    %v991 = vunpack.c.h.b16 %v205
    %v992 = vunpack.c.l.b16 %v206
    %v993 = vunpack.c.h.b16 %v206
    %v994 = vunpack.c.l.b16 %v207
    %v995 = vunpack.c.h.b16 %v207
    %v996 = vunpack.c.l.b16 %v208
    %v997 = vunpack.c.h.b16 %v208
    %v998 = vunpack.c.l.b16 %v209
    %v999 = vunpack.c.h.b16 %v209
    %v1000 = vunpack.c.l.b16 %v210
    %v1001 = vunpack.c.h.b16 %v210
    %v1002 = vunpack.c.l.b16 %v211
    %v1003 = vunpack.c.h.b16 %v211
    %v1004 = vunpack.c.l.b16 %v212
    %v1005 = vunpack.c.h.b16 %v212
    %v1006 = vunpack.c.l.b16 %v213
    %v1007 = vunpack.c.h.b16 %v213
    %v1008 = vunpack.c.l.b16 %v214
    %v1009 = vunpack.c.h.b16 %v214
    %v1010 = vunpack.c.l.b16 %v215
    %v1011 = vunpack.c.h.b16 %v215
    %v1012 = vunpack.c.l.b16 %v216
    %v1013 = vunpack.c.h.b16 %v216
    %v1014 = vunpack.c.l.b16 %v217
    %v1015 = vunpack.c.h.b16 %v217
    %v1016 = vunpack.c.l.b16 %v218
    %v1017 = vunpack.c.h.b16 %v218
    %v1018 = vunpack.c.l.b16 %v219
    %v1019 = vunpack.c.h.b16 %v219
    %v1020 = vunpack.c.l.b16 %v220
    %v1021 = vunpack.c.h.b16 %v220
    %v1022 = vunpack.c.l.b16 %v221
    %v1023 = vunpack.c.h.b16 %v221
    %v1024 = vunpack.c.l.b16 %v222
    %v1025 = vunpack.c.h.b16 %v222
    %v1026 = vunpack.c.l.b16 %v223
    %v1027 = vunpack.c.h.b16 %v223
    %v1028 = vunpack.c.l.b16 %v224
    %v1029 = vunpack.c.h.b16 %v224
    %v1030 = vunpack.c.l.b16 %v225
    %v1031 = vunpack.c.h.b16 %v225
    %v1032 = vunpack.c.l.b16 %v226
    %v1033 = vunpack.c.h.b16 %v226
    %v1034 = vunpack.c.l.b16 %v227
    %v1035 = vunpack.c.h.b16 %v227
    %v1036 = vunpack.c.l.b16 %v228
    %v1037 = vunpack.c.h.b16 %v228
    %v1038 = vunpack.c.l.b16 %v229
    %v1039 = vunpack.c.h.b16 %v229
    %v1040 = vunpack.c.l.b16 %v230
    %v1041 = vunpack.c.h.b16 %v230
    %v1042 = vunpack.c.l.b16 %v231
    %v1043 = vunpack.c.h.b16 %v231
    %v1044 = vunpack.c.l.b16 %v232
    %v1045 = vunpack.c.h.b16 %v232
    %v1046 = vunpack.c.l.b16 %v233
    %v1047 = vunpack.c.h.b16 %v233
    %v1048 = vunpack.c.l.b16 %v234
    %v1049 = vunpack.c.h.b16 %v234
    %v1050 = vunpack.c.l.b16 %v235
    %v1051 = vunpack.c.h.b16 %v235
    %v1052 = vunpack.c.l.b16 %v236
    %v1053 = vunpack.c.h.b16 %v236
    %v1054 = vunpack.c.l.b16 %v237
    %v1055 = vunpack.c.h.b16 %v237
    %v1056 = vunpack.c.l.b16 %v238
    %v1057 = vunpack.c.h.b16 %v238
    %v1058 = vunpack.c.l.b16 %v239
    %v1059 = vunpack.c.h.b16 %v239
    %v1060 = vunpack.c.l.b16 %v240
    %v1061 = vunpack.c.h.b16 %v240
    %v1062 = vunpack.c.l.b16 %v241
    %v1063 = vunpack.c.h.b16 %v241
    %v1064 = vunpack.c.l.b16 %v242
    %v1065 = vunpack.c.h.b16 %v242
    %v1066 = vunpack.c.l.b16 %v243
    %v1067 = vunpack.c.h.b16 %v243
    %v1068 = vunpack.c.l.b16 %v244
    %v1069 = vunpack.c.h.b16 %v244
    %v1070 = vunpack.c.l.b16 %v245
    %v1071 = vunpack.c.h.b16 %v245
    %v1072 = vunpack.c.l.b16 %v246
    %v1073 = vunpack.c.h.b16 %v246
    %v1074 = vunpack.c.l.b16 %v247
    %v1075 = vunpack.c.h.b16 %v247
    %v1076 = vunpack.c.l.b16 %v248
    %v1077 = vunpack.c.h.b16 %v248
    %v1078 = vunpack.c.l.b16 %v249
    %v1079 = vunpack.c.h.b16 %v249
    %v1080 = vunpack.c.l.b16 %v250
    %v1081 = vunpack.c.h.b16 %v250
    %v1082 = vunpack.c.l.b16 %v251
    %v1083 = vunpack.c.h.b16 %v251
    %v1084 = vunpack.c.l.b16 %v252
    %v1085 = vunpack.c.h.b16 %v252
    %v1086 = vunpack.c.l.b16 %v253
    %v1087 = vunpack.c.h.b16 %v253
    %v1088 = vunpack.c.l.b16 %v254
    %v1089 = vunpack.c.h.b16 %v254
    %v1090 = vunpack.c.l.b16 %v255
    %v1091 = vunpack.c.h.b16 %v255
    %v1092 = vunpack.c.l.b16 %v256
    %v1093 = vunpack.c.h.b16 %v256
    %v1094 = vunpack.c.l.b16 %v257
    %v1095 = vunpack.c.h.b16 %v257
    %v1096 = vunpack.c.l.b16 %v258
    %v1097 = vunpack.c.h.b16 %v258
    %v1098 = vunpack.c.l.b16 %v259
    %v1099 = vunpack.c.h.b16 %v259
    %v1100 = vunpack.c.l.b16 %v260
    %v1101 = vunpack.c.h.b16 %v260
    %v1102 = vunpack.c.l.b16 %v261
    %v1103 = vunpack.c.h.b16 %v261
    %v1104 = vunpack.c.l.b16 %v262
    %v1105 = vunpack.c.h.b16 %v262
    %v1106 = vunpack.c.l.b16 %v263
    %v1107 = vunpack.c.h.b16 %v263
    %v1108 = vunpack.c.l.b16 %v264
    %v1109 = vunpack.c.h.b16 %v264
    %v1110 = vunpack.c.l.b16 %v265
    %v1111 = vunpack.c.h.b16 %v265
    %v1112 = vunpack.c.l.b16 %v266
    %v1113 = vunpack.c.h.b16 %v266
    %v1114 = vunpack.c.l.b16 %v267
    %v1115 = vunpack.c.h.b16 %v267
    %v1116 = vunpack.c.l.b16 %v268
    %v1117 = vunpack.c.h.b16 %v268
    %v1118 = vunpack.c.l.b16 %v269
    %v1119 = vunpack.c.h.b16 %v269
    %v1120 = vunpack.c.l.b16 %v270
    %v1121 = vunpack.c.h.b16 %v270
    %v1122 = vunpack.c.l.b16 %v271
    %v1123 = vunpack.c.h.b16 %v271
    %v1124 = vunpack.c.l.b16 %v272
    %v1125 = vunpack.c.h.b16 %v272
    %v1126 = vunpack.c.l.b16 %v273
    %v1127 = vunpack.c.h.b16 %v273
    %v1128 = vunpack.c.l.b16 %v274
    %v1129 = vunpack.c.h.b16 %v274
    %v1130 = vunpack.c.l.b16 %v275
    %v1131 = vunpack.c.h.b16 %v275
    %v1132 = vunpack.c.l.b16 %v276
    %v1133 = vunpack.c.h.b16 %v276
    %v1134 = vunpack.c.l.b16 %v277
    %v1135 = vunpack.c.h.b16 %v277
    %v1136 = vunpack.c.l.b16 %v278
    %v1137 = vunpack.c.h.b16 %v278
    %v1138 = vunpack.c.l.b16 %v279
    %v1139 = vunpack.c.h.b16 %v279
    %v1140 = vunpack.c.l.b16 %v280
    %v1141 = vunpack.c.h.b16 %v280
    %v1142 = vunpack.c.l.b16 %v281
    %v1143 = vunpack.c.h.b16 %v281
    %v1144 = vunpack.c.l.b16 %v282
    %v1145 = vunpack.c.h.b16 %v282
    %v1146 = vunpack.c.l.b16 %v283
    %v1147 = vunpack.c.h.b16 %v283
    %v1148 = vunpack.c.l.b16 %v284
    %v1149 = vunpack.c.h.b16 %v284
    %v1150 = vunpack.c.l.b16 %v285
    %v1151 = vunpack.c.h.b16 %v285
    %v1152 = vunpack.c.l.b16 %v286
    %v1153 = vunpack.c.h.b16 %v286
    %v1154 = vunpack.c.l.b16 %v287
    %v1155 = vunpack.c.h.b16 %v287
    %v1156 = vunpack.c.l.b16 %v288
    %v1157 = vunpack.c.h.b16 %v288
    %v1158 = vunpack.c.l.b16 %v289
    %v1159 = vunpack.c.h.b16 %v289
    %v1160 = vunpack.c.l.b16 %v290
    %v1161 = vunpack.c.h.b16 %v290
    %v1162 = vunpack.c.l.b16 %v291
    %v1163 = vunpack.c.h.b16 %v291
    %v1164 = vunpack.c.l.b16 %v292
    %v1165 = vunpack.c.h.b16 %v292
    %v1166 = vunpack.c.l.b16 %v293
    %v1167 = vunpack.c.h.b16 %v293
    %v1168 = vunpack.c.l.b16 %v294
    %v1169 = vunpack.c.h.b16 %v294
    %v1170 = vunpack.c.l.b16 %v295
    %v1171 = vunpack.c.h.b16 %v295
    %v1172 = vunpack.c.l.b16 %v296
    %v1173 = vunpack.c.h.b16 %v296
    %v1174 = vunpack.c.l.b16 %v297
    %v1175 = vunpack.c.h.b16 %v297
    %v1176 = vunpack.c.l.b16 %v298
    %v1177 = vunpack.c.h.b16 %v298
    %v1178 = vunpack.c.l.b16 %v299
    %v1179 = vunpack.c.h.b16 %v299
    %v1180 = vunpack.c.l.b16 %v300
    %v1181 = vunpack.c.h.b16 %v300
    %v1182 = vunpack.c.l.b16 %v301
    %v1183 = vunpack.c.h.b16 %v301
    %v1184 = vunpack.c.l.b16 %v302
    %v1185 = vunpack.c.h.b16 %v302
    %v1186 = vunpack.c.l.b16 %v303
    %v1187 = vunpack.c.h.b16 %v303
    %v1188 = vunpack.c.l.b16 %v304
    %v1189 = vunpack.c.h.b16 %v304
    %v1190 = vunpack.c.l.b16 %v305
    %v1191 = vunpack.c.h.b16 %v305
    %v1192 = vunpack.c.l.b16 %v306
    %v1193 = vunpack.c.h.b16 %v306
    %v1194 = vunpack.c.l.b16 %v307
    %v1195 = vunpack.c.h.b16 %v307
    %v1196 = vunpack.c.l.b16 %v308
    %v1197 = vunpack.c.h.b16 %v308
    %v1198 = vunpack.c.l.b16 %v309
    %v1199 = vunpack.c.h.b16 %v309
    %v1200 = vunpack.c.l.b16 %v310
    %v1201 = vunpack.c.h.b16 %v310
    %v1202 = vunpack.c.l.b16 %v311
    %v1203 = vunpack.c.h.b16 %v311
    %v1204 = vunpack.c.l.b16 %v312
    %v1205 = vunpack.c.h.b16 %v312
    %v1206 = vunpack.c.l.b16 %v313
    %v1207 = vunpack.c.h.b16 %v313
    %v1208 = vunpack.c.l.b16 %v314
    %v1209 = vunpack.c.h.b16 %v314
    %v1210 = vunpack.c.l.b16 %v315
    %v1211 = vunpack.c.h.b16 %v315
    %v1212 = vunpack.c.l.b16 %v316
    %v1213 = vunpack.c.h.b16 %v316
    %v1214 = vunpack.c.l.b16 %v317
    %v1215 = vunpack.c.h.b16 %v317
    %v1216 = vunpack.c.l.b16 %v318
    %v1217 = vunpack.c.h.b16 %v318
    %v1218 = vunpack.c.l.b16 %v319
    %v1219 = vunpack.c.h.b16 %v319
    %v1220 = vunpack.c.l.b16 %v320
    %v1221 = vunpack.c.h.b16 %v320
    %v1222 = vunpack.c.l.b16 %v321
    %v1223 = vunpack.c.h.b16 %v321
    %v1224 = vunpack.c.l.b16 %v322
    %v1225 = vunpack.c.h.b16 %v322
    %v1226 = vunpack.c.l.b16 %v323
    %v1227 = vunpack.c.h.b16 %v323
    %v1228 = vunpack.c.l.b16 %v324
    %v1229 = vunpack.c.h.b16 %v324
    %v1230 = vunpack.c.l.b16 %v325
    %v1231 = vunpack.c.h.b16 %v325
    %v1232 = vunpack.c.l.b16 %v326
    %v1233 = vunpack.c.h.b16 %v326
    %v1234 = vunpack.c.l.b16 %v327
    %v1235 = vunpack.c.h.b16 %v327
    %v1236 = vunpack.c.l.b16 %v328
    %v1237 = vunpack.c.h.b16 %v328
    %v1238 = vunpack.c.l.b16 %v329
    %v1239 = vunpack.c.h.b16 %v329
    %v1240 = vunpack.c.l.b16 %v330
    %v1241 = vunpack.c.h.b16 %v330
    %v1242 = vunpack.c.l.b16 %v331
    %v1243 = vunpack.c.h.b16 %v331
    %v1244 = vunpack.c.l.b16 %v332
    %v1245 = vunpack.c.h.b16 %v332
    %v1246 = vunpack.c.l.b16 %v333
    %v1247 = vunpack.c.h.b16 %v333
    %v1248 = vunpack.c.l.b16 %v334
    %v1249 = vunpack.c.h.b16 %v334
    %v1250 = vunpack.c.l.b16 %v335
    %v1251 = vunpack.c.h.b16 %v335
    %v1252 = vunpack.c.l.b16 %v336
    %v1253 = vunpack.c.h.b16 %v336
    %v1254 = vunpack.c.l.b16 %v337
    %v1255 = vunpack.c.h.b16 %v337
    %v1256 = vunpack.c.l.b16 %v338
    %v1257 = vunpack.c.h.b16 %v338
    %v1258 = vunpack.c.l.b16 %v339
    %v1259 = vunpack.c.h.b16 %v339
    %v1260 = vunpack.c.l.b16 %v340
    %v1261 = vunpack.c.h.b16 %v340
    %v1262 = vunpack.c.l.b16 %v341
    %v1263 = vunpack.c.h.b16 %v341
    %v1264 = vunpack.c.l.b16 %v342
    %v1265 = vunpack.c.h.b16 %v342
    %v1266 = vunpack.c.l.b16 %v343
    %v1267 = vunpack.c.h.b16 %v343
    %v1268 = vunpack.c.l.b16 %v344
    %v1269 = vunpack.c.h.b16 %v344
    %v1270 = vunpack.c.l.b16 %v345
    %v1271 = vunpack.c.h.b16 %v345
    %v1272 = vunpack.c.l.b16 %v346
    %v1273 = vunpack.c.h.b16 %v346
    %v1274 = vunpack.c.l.b16 %v347
    %v1275 = vunpack.c.h.b16 %v347
    %v1276 = vunpack.c.l.b16 %v348
    %v1277 = vunpack.c.h.b16 %v348
    %v1278 = vunpack.c.l.b16 %v349
    %v1279 = vunpack.c.h.b16 %v349
    %v1280 = vunpack.c.l.b16 %v350
    %v1281 = vunpack.c.h.b16 %v350
    %v1282 = vunpack.c.l.b16 %v351
    %v1283 = vunpack.c.h.b16 %v351
    %v1284 = vunpack.c.l.b16 %v352
    %v1285 = vunpack.c.h.b16 %v352
    %v1286 = vunpack.c.l.b16 %v353
    %v1287 = vunpack.c.h.b16 %v353
    %v1288 = vunpack.c.l.b16 %v354
    %v1289 = vunpack.c.h.b16 %v354
    %v1290 = vunpack.c.l.b16 %v355
    %v1291 = vunpack.c.h.b16 %v355
    %v1292 = vunpack.c.l.b16 %v356
    %v1293 = vunpack.c.h.b16 %v356
    %v1294 = vunpack.c.l.b16 %v357
    %v1295 = vunpack.c.h.b16 %v357
    %v1296 = vunpack.c.l.b16 %v358
    %v1297 = vunpack.c.h.b16 %v358
    %v1298 = vunpack.c.l.b16 %v359
    %v1299 = vunpack.c.h.b16 %v359
    %v1300 = vunpack.c.l.b16 %v360
    %v1301 = vunpack.c.h.b16 %v360
    %v1302 = vunpack.c.l.b16 %v361
    %v1303 = vunpack.c.h.b16 %v361
    %v1304 = vunpack.c.l.b16 %v362
    %v1305 = vunpack.c.h.b16 %v362
    %v1306 = vunpack.c.l.b16 %v363
    %v1307 = vunpack.c.h.b16 %v363
    %v1308 = vunpack.c.l.b16 %v364
    %v1309 = vunpack.c.h.b16 %v364
    %v1310 = vunpack.c.l.b16 %v365
    %v1311 = vunpack.c.h.b16 %v365
    %v1312 = vunpack.c.l.b16 %v366
    %v1313 = vunpack.c.h.b16 %v366
    %v1314 = vunpack.c.l.b16 %v367
    %v1315 = vunpack.c.h.b16 %v367
    %v1316 = vunpack.c.l.b16 %v368
    %v1317 = vunpack.c.h.b16 %v368
    %v1318 = vunpack.c.l.b16 %v369
    %v1319 = vunpack.c.h.b16 %v369
    %v1320 = vunpack.c.l.b16 %v370
    %v1321 = vunpack.c.h.b16 %v370
    %v1322 = vunpack.c.l.b16 %v371
    %v1323 = vunpack.c.h.b16 %v371
    %v1324 = vunpack.c.l.b16 %v372
    %v1325 = vunpack.c.h.b16 %v372
    %v1326 = vunpack.c.l.b16 %v373
    %v1327 = vunpack.c.h.b16 %v373
    %v1328 = vunpack.c.l.b16 %v374
    %v1329 = vunpack.c.h.b16 %v374
    %v1330 = vunpack.c.l.b16 %v375
    %v1331 = vunpack.c.h.b16 %v375
    %v1332 = vunpack.c.l.b16 %v376
    %v1333 = vunpack.c.h.b16 %v376
    %v1334 = vunpack.c.l.b16 %v377
    %v1335 = vunpack.c.h.b16 %v377
    %v1336 = vunpack.c.l.b16 %v378
    %v1337 = vunpack.c.h.b16 %v378
    %v1338 = vunpack.c.l.b16 %v379
    %v1339 = vunpack.c.h.b16 %v379
    %v1340 = vunpack.c.l.b16 %v380
    %v1341 = vunpack.c.h.b16 %v380
    %v1342 = vunpack.c.l.b16 %v381
    %v1343 = vunpack.c.h.b16 %v381
    %v1344 = vunpack.c.l.b16 %v382
    %v1345 = vunpack.c.h.b16 %v382
    %v1346 = vunpack.c.l.b16 %v383
    %v1347 = vunpack.c.h.b16 %v383
    %v1348 = vunpack.c.l.b16 %v384
    %v1349 = vunpack.c.h.b16 %v384
    %v1350 = vunpack.c.l.b16 %v385
    %v1351 = vunpack.c.h.b16 %v385
    %v1352 = vunpack.c.l.b16 %v386
    %v1353 = vunpack.c.h.b16 %v386
    %v1354 = vunpack.c.l.b16 %v387
    %v1355 = vunpack.c.h.b16 %v387
    %v1356 = vunpack.c.l.b16 %v388
    %v1357 = vunpack.c.h.b16 %v388
    %v1358 = vunpack.c.l.b16 %v389
    %v1359 = vunpack.c.h.b16 %v389
    %v1360 = vunpack.c.l.b16 %v390
    %v1361 = vunpack.c.h.b16 %v390
    %v1362 = vunpack.c.l.b16 %v391
    %v1363 = vunpack.c.h.b16 %v391
    %v1364 = vunpack.c.l.b16 %v392
    %v1365 = vunpack.c.h.b16 %v392
    %v1366 = vunpack.c.l.b16 %v393
    %v1367 = vunpack.c.h.b16 %v393
    %v1368 = vunpack.c.l.b16 %v394
    %v1369 = vunpack.c.h.b16 %v394
    %v1370 = vunpack.c.l.b16 %v395
    %v1371 = vunpack.c.h.b16 %v395
    %v1372 = vunpack.c.l.b16 %v396
    %v1373 = vunpack.c.h.b16 %v396
    %v1374 = vunpack.c.l.b16 %v397
    %v1375 = vunpack.c.h.b16 %v397
    %v1376 = vunpack.c.l.b16 %v398
    %v1377 = vunpack.c.h.b16 %v398
    %v1378 = vunpack.c.l.b16 %v399
    %v1379 = vunpack.c.h.b16 %v399
    %v1380 = vunpack.c.l.b16 %v400
    %v1381 = vunpack.c.h.b16 %v400
    %v1382 = vunpack.c.l.b16 %v401
    %v1383 = vunpack.c.h.b16 %v401
    %v1384 = vunpack.c.l.b16 %v402
    %v1385 = vunpack.c.h.b16 %v402
    %v1386 = vunpack.c.l.b16 %v403
    %v1387 = vunpack.c.h.b16 %v403
    %v1388 = vunpack.c.l.b16 %v404
    %v1389 = vunpack.c.h.b16 %v404
    %v1390 = vunpack.c.l.b16 %v405
    %v1391 = vunpack.c.h.b16 %v405
    %v1392 = vunpack.c.l.b16 %v406
    %v1393 = vunpack.c.h.b16 %v406
    %v1394 = vunpack.c.l.b16 %v407
    %v1395 = vunpack.c.h.b16 %v407
    %v1396 = vunpack.c.l.b16 %v408
    %v1397 = vunpack.c.h.b16 %v408
    %v1398 = vunpack.c.l.b16 %v409
    %v1399 = vunpack.c.h.b16 %v409
    %v1400 = vunpack.c.l.b16 %v410
    %v1401 = vunpack.c.h.b16 %v410
    %v1402 = vunpack.c.l.b16 %v411
    %v1403 = vunpack.c.h.b16 %v411
    %v1404 = vunpack.c.l.b16 %v412
    %v1405 = vunpack.c.h.b16 %v412
    %v1406 = vunpack.c.l.b16 %v413
    %v1407 = vunpack.c.h.b16 %v413
    %v1408 = vunpack.c.l.b16 %v414
    %v1409 = vunpack.c.h.b16 %v414
    %v1410 = vunpack.c.l.b16 %v415
    %v1411 = vunpack.c.h.b16 %v415
    %v1412 = vunpack.c.l.b16 %v416
    %v1413 = vunpack.c.h.b16 %v416
    %v1414 = vunpack.c.l.b16 %v417
    %v1415 = vunpack.c.h.b16 %v417
    %v1416 = vunpack.c.l.b16 %v418
    %v1417 = vunpack.c.h.b16 %v418
    %v1418 = vunpack.c.l.b16 %v419
    %v1419 = vunpack.c.h.b16 %v419
    %v1420 = vunpack.c.l.b16 %v420
    %v1421 = vunpack.c.h.b16 %v420
    %v1422 = vunpack.c.l.b16 %v421
    %v1423 = vunpack.c.h.b16 %v421
    %v1424 = vunpack.c.l.b16 %v422
    %v1425 = vunpack.c.h.b16 %v422
    %v1426 = vunpack.c.l.b16 %v423
    %v1427 = vunpack.c.h.b16 %v423
    %v1428 = vunpack.c.l.b16 %v424
    %v1429 = vunpack.c.h.b16 %v424
    %v1430 = vunpack.c.l.b16 %v425
    %v1431 = vunpack.c.h.b16 %v425
    %v1432 = vunpack.c.l.b16 %v426
    %v1433 = vunpack.c.h.b16 %v426
    %v1434 = vunpack.c.l.b16 %v427
    %v1435 = vunpack.c.h.b16 %v427
    %v1436 = vunpack.c.l.b16 %v428
    %v1437 = vunpack.c.h.b16 %v428
    %v1438 = vunpack.c.l.b16 %v429
    %v1439 = vunpack.c.h.b16 %v429
    %v1440 = vunpack.c.l.b16 %v430
    %v1441 = vunpack.c.h.b16 %v430
    %v1442 = vunpack.c.l.b16 %v431
    %v1443 = vunpack.c.h.b16 %v431
    %v1444 = vunpack.c.l.b16 %v432
    %v1445 = vunpack.c.h.b16 %v432
    %v1446 = vunpack.c.l.b16 %v433
    %v1447 = vunpack.c.h.b16 %v433
    %v1448 = vunpack.c.l.b16 %v434
    %v1449 = vunpack.c.h.b16 %v434
    %v1450 = vunpack.c.l.b16 %v435
    %v1451 = vunpack.c.h.b16 %v435
    %v1452 = vunpack.c.l.b16 %v436
    %v1453 = vunpack.c.h.b16 %v436
    %v1454 = vunpack.c.l.b16 %v437
    %v1455 = vunpack.c.h.b16 %v437
    %v1456 = vunpack.c.l.b16 %v438
    %v1457 = vunpack.c.h.b16 %v438
    %v1458 = vunpack.c.l.b16 %v439
    %v1459 = vunpack.c.h.b16 %v439
    %v1460 = vunpack.c.l.b16 %v440
    %v1461 = vunpack.c.h.b16 %v440
    %v1462 = vunpack.c.l.b16 %v441
    %v1463 = vunpack.c.h.b16 %v441
    %v1464 = vunpack.c.l.b16 %v442
    %v1465 = vunpack.c.h.b16 %v442
    %v1466 = vunpack.c.l.b16 %v443
    %v1467 = vunpack.c.h.b16 %v443
    %v1468 = vunpack.c.l.b16 %v444
    %v1469 = vunpack.c.h.b16 %v444
    %v1470 = vunpack.c.l.b16 %v445
    %v1471 = vunpack.c.h.b16 %v445
    %v1472 = vunpack.c.l.b16 %v446
    %v1473 = vunpack.c.h.b16 %v446
    %v1474 = vunpack.c.l.b16 %v447
    %v1475 = vunpack.c.h.b16 %v447
    %v1476 = vunpack.c.l.b16 %v448
    %v1477 = vunpack.c.h.b16 %v448
    %v1478 = vunpack.c.l.b16 %v449
    %v1479 = vunpack.c.h.b16 %v449
    %v1480 = vunpack.c.l.b16 %v450
    %v1481 = vunpack.c.h.b16 %v450
    %v1482 = vunpack.c.l.b16 %v451
    %v1483 = vunpack.c.h.b16 %v451
    %v1484 = vunpack.c.l.b16 %v452
    %v1485 = vunpack.c.h.b16 %v452
    %v1486 = vunpack.c.l.b16 %v453
    %v1487 = vunpack.c.h.b16 %v453
    %v1488 = vunpack.c.l.b16 %v454
    %v1489 = vunpack.c.h.b16 %v454
    %v1490 = vunpack.c.l.b16 %v455
    %v1491 = vunpack.c.h.b16 %v455
    %v1492 = vunpack.c.l.b16 %v456
    %v1493 = vunpack.c.h.b16 %v456
    %v1494 = vunpack.c.l.b16 %v457
    %v1495 = vunpack.c.h.b16 %v457
    %v1496 = vunpack.c.l.b16 %v458
    %v1497 = vunpack.c.h.b16 %v458
    %v1498 = vunpack.c.l.b16 %v459
    %v1499 = vunpack.c.h.b16 %v459
    %v1500 = vunpack.c.l.b16 %v460
    %v1501 = vunpack.c.h.b16 %v460
    %v1502 = vunpack.c.l.b16 %v461
    %v1503 = vunpack.c.h.b16 %v461
    %v1504 = vpack.c.b16 %v866, %v864
    %v1505 = vpack.c.b16 %v867, %v865
    %v1506 = vpack.c.b16 %v870, %v868
    %v1507 = vpack.c.b16 %v871, %v869
    %v1508 = vpack.c.b16 %v874, %v872
    %v1509 = vpack.c.b16 %v875, %v873
    %v1510 = vpack.c.b16 %v878, %v876
    %v1511 = vpack.c.b16 %v879, %v877
    %v1512 = vpack.c.b16 %v882, %v880
    %v1513 = vpack.c.b16 %v883, %v881
    %v1514 = vpack.c.b16 %v886, %v884
    %v1515 = vpack.c.b16 %v887, %v885
    %v1516 = vpack.c.b16 %v890, %v888
    %v1517 = vpack.c.b16 %v891, %v889
    %v1518 = vpack.c.b16 %v894, %v892
    %v1519 = vpack.c.b16 %v895, %v893
    %v1520 = vpack.c.b16 %v898, %v896
    %v1521 = vpack.c.b16 %v899, %v897
    %v1522 = vpack.c.b16 %v902, %v900
    %v1523 = vpack.c.b16 %v903, %v901
    %v1524 = vpack.c.b16 %v906, %v904
    %v1525 = vpack.c.b16 %v907, %v905
    %v1526 = vpack.c.b16 %v910, %v908
    %v1527 = vpack.c.b16 %v911, %v909
    %v1528 = vpack.c.b16 %v914, %v912
    %v1529 = vpack.c.b16 %v915, %v913
    %v1530 = vpack.c.b16 %v918, %v916
    %v1531 = vpack.c.b16 %v919, %v917
    %v1532 = vpack.c.b16 %v922, %v920
    %v1533 = vpack.c.b16 %v923, %v921
    %v1534 = vpack.c.b16 %v926, %v924
    %v1535 = vpack.c.b16 %v927, %v925
    %v1536 = vpack.c.b16 %v930, %v928
    %v1537 = vpack.c.b16 %v931, %v929
    %v1538 = vpack.c.b16 %v934, %v932
    %v1539 = vpack.c.b16 %v935, %v933
    %v1540 = vpack.c.b16 %v938, %v936
    %v1541 = vpack.c.b16 %v939, %v937
    %v1542 = vpack.c.b16 %v942, %v940
    %v1543 = vpack.c.b16 %v943, %v941
    %v1544 = vpack.c.b16 %v946, %v944
    %v1545 = vpack.c.b16 %v947, %v945
    %v1546 = vpack.c.b16 %v950, %v948
    %v1547 = vpack.c.b16 %v951, %v949
    %v1548 = vpack.c.b16 %v954, %v952
    %v1549 = vpack.c.b16 %v955, %v953
    %v1550 = vpack.c.b16 %v958, %v956
    %v1551 = vpack.c.b16 %v959, %v957
    %v1552 = vpack.c.b16 %v962, %v960
    %v1553 = vpack.c.b16 %v963, %v961
    %v1554 = vpack.c.b16 %v966, %v964
    %v1555 = vpack.c.b16 %v967, %v965
    %v1556 = vpack.c.b16 %v970, %v968
    %v1557 = vpack.c.b16 %v971, %v969
    %v1558 = vpack.c.b16 %v974, %v972
    %v1559 = vpack.c.b16 %v975, %v973
    %v1560 = vpack.c.b16 %v978, %v976
    %v1561 = vpack.c.b16 %v979, %v977
    %v1562 = vpack.c.b16 %v982, %v980
    %v1563 = vpack.c.b16 %v983, %v981
    %v1564 = vpack.c.b16 %v986, %v984
    %v1565 = vpack.c.b16 %v987, %v985
    %v1566 = vpack.c.b16 %v990, %v988
    %v1567 = vpack.c.b16 %v991, %v989
    %v1568 = vpack.c.b16 %v994, %v992
    %v1569 = vpack.c.b16 %v995, %v993
    %v1570 = vpack.c.b16 %v998, %v996
    %v1571 = vpack.c.b16 %v999, %v997
    %v1572 = vpack.c.b16 %v1002, %v1000
    %v1573 = vpack.c.b16 %v1003, %v1001
    %v1574 = vpack.c.b16 %v1006, %v1004
    %v1575 = vpack.c.b16 %v1007, %v1005
    %v1576 = vpack.c.b16 %v1010, %v1008
    %v1577 = vpack.c.b16 %v1011, %v1009
    %v1578 = vpack.c.b16 %v1014, %v1012
    %v1579 = vpack.c.b16 %v1015, %v1013
    %v1580 = vpack.c.b16 %v1018, %v1016
    %v1581 = vpack.c.b16 %v1019, %v1017
    %v1582 = vpack.c.b16 %v1022, %v1020
    %v1583 = vpack.c.b16 %v1023, %v1021
    %v1584 = vpack.c.b16 %v1026, %v1024
    %v1585 = vpack.c.b16 %v1027, %v1025
    %v1586 = vpack.c.b16 %v1030, %v1028
    %v1587 = vpack.c.b16 %v1031, %v1029
    %v1588 = vpack.c.b16 %v1034, %v1032
    %v1589 = vpack.c.b16 %v1035, %v1033
    %v1590 = vpack.c.b16 %v1038, %v1036
    %v1591 = vpack.c.b16 %v1039, %v1037
    %v1592 = vpack.c.b16 %v1042, %v1040
    %v1593 = vpack.c.b16 %v1043, %v1041
    %v1594 = vpack.c.b16 %v1046, %v1044
    %v1595 = vpack.c.b16 %v1047, %v1045
    %v1596 = vpack.c.b16 %v1050, %v1048
    %v1597 = vpack.c.b16 %v1051, %v1049
    %v1598 = vpack.c.b16 %v1054, %v1052
    %v1599 = vpack.c.b16 %v1055, %v1053
    %v1600 = vpack.c.b16 %v1058, %v1056
    %v1601 = vpack.c.b16 %v1059, %v1057
    %v1602 = vpack.c.b16 %v1062, %v1060
    %v1603 = vpack.c.b16 %v1063, %v1061
    %v1604 = vpack.c.b16 %v1066, %v1064
    %v1605 = vpack.c.b16 %v1067, %v1065
    %v1606 = vpack.c.b16 %v1070, %v1068
    %v1607 = vpack.c.b16 %v1071, %v1069
    %v1608 = vpack.c.b16 %v1074, %v1072
    %v1609 = vpack.c.b16 %v1075, %v1073
    %v1610 = vpack.c.b16 %v1078, %v1076
    %v1611 = vpack.c.b16 %v1079, %v1077
    %v1612 = vpack.c.b16 %v1082, %v1080
    %v1613 = vpack.c.b16 %v1083, %v1081
    %v1614 = vpack.c.b16 %v1086, %v1084
    %v1615 = vpack.c.b16 %v1087, %v1085
    %v1616 = vpack.c.b16 %v1090, %v1088
    %v1617 = vpack.c.b16 %v1091, %v1089
    %v1618 = vpack.c.b16 %v1094, %v1092
    %v1619 = vpack.c.b16 %v1095, %v1093
    %v1620 = vpack.c.b16 %v1098, %v1096
    %v1621 = vpack.c.b16 %v1099, %v1097
    %v1622 = vpack.c.b16 %v1102, %v1100
    %v1623 = vpack.c.b16 %v1103, %v1101
    %v1624 = vpack.c.b16 %v1106, %v1104
    %v1625 = vpack.c.b16 %v1107, %v1105
    %v1626 = vpack.c.b16 %v1110, %v1108
    %v1627 = vpack.c.b16 %v1111, %v1109
    %v1628 = vpack.c.b16 %v1114, %v1112
    %v1629 = vpack.c.b16 %v1115, %v1113
    %v1630 = vpack.c.b16 %v1118, %v1116
    %v1631 = vpack.c.b16 %v1119, %v1117
    %v1632 = vpack.c.b16 %v1122, %v1120
    %v1633 = vpack.c.b16 %v1123, %v1121
    %v1634 = vpack.c.b16 %v1126, %v1124
    %v1635 = vpack.c.b16 %v1127, %v1125
    %v1636 = vpack.c.b16 %v1130, %v1128
    %v1637 = vpack.c.b16 %v1131, %v1129
    %v1638 = vpack.c.b16 %v1134, %v1132
    %v1639 = vpack.c.b16 %v1135, %v1133
    %v1640 = vpack.c.b16 %v1138, %v1136
    %v1641 = vpack.c.b16 %v1139, %v1137
    %v1642 = vpack.c.b16 %v1142, %v1140
    %v1643 = vpack.c.b16 %v1143, %v1141
    %v1644 = vpack.c.b16 %v1146, %v1144
    %v1645 = vpack.c.b16 %v1147, %v1145
    %v1646 = vpack.c.b16 %v1150, %v1148
    %v1647 = vpack.c.b16 %v1151, %v1149
    %v1648 = vpack.c.b16 %v1154, %v1152
    %v1649 = vpack.c.b16 %v1155, %v1153
    %v1650 = vpack.c.b16 %v1158, %v1156
    %v1651 = vpack.c.b16 %v1159, %v1157
    %v1652 = vpack.c.b16 %v1162, %v1160
    %v1653 = vpack.c.b16 %v1163, %v1161
    %v1654 = vpack.c.b16 %v1166, %v1164
    %v1655 = vpack.c.b16 %v1167, %v1165
    %v1656 = vpack.c.b16 %v1170, %v1168
    %v1657 = vpack.c.b16 %v1171, %v1169
    %v1658 = vpack.c.b16 %v1174, %v1172
    %v1659 = vpack.c.b16 %v1175, %v1173
    %v1660 = vpack.c.b16 %v1178, %v1176
    %v1661 = vpack.c.b16 %v1179, %v1177
    %v1662 = vpack.c.b16 %v1182, %v1180
    %v1663 = vpack.c.b16 %v1183, %v1181
    %v1664 = vpack.c.b16 %v1186, %v1184
    %v1665 = vpack.c.b16 %v1187, %v1185
    %v1666 = vpack.c.b16 %v1190, %v1188
    %v1667 = vpack.c.b16 %v1191, %v1189
    %v1668 = vpack.c.b16 %v1194, %v1192
    %v1669 = vpack.c.b16 %v1195, %v1193
    %v1670 = vpack.c.b16 %v1198, %v1196
    %v1671 = vpack.c.b16 %v1199, %v1197
    %v1672 = vpack.c.b16 %v1202, %v1200
    %v1673 = vpack.c.b16 %v1203, %v1201
    %v1674 = vpack.c.b16 %v1206, %v1204
    %v1675 = vpack.c.b16 %v1207, %v1205
    %v1676 = vpack.c.b16 %v1210, %v1208
    %v1677 = vpack.c.b16 %v1211, %v1209
    %v1678 = vpack.c.b16 %v1214, %v1212
    %v1679 = vpack.c.b16 %v1215, %v1213
    %v1680 = vpack.c.b16 %v1218, %v1216
    %v1681 = vpack.c.b16 %v1219, %v1217
    %v1682 = vpack.c.b16 %v1222, %v1220
    %v1683 = vpack.c.b16 %v1223, %v1221
    %v1684 = vpack.c.b16 %v1226, %v1224
    %v1685 = vpack.c.b16 %v1227, %v1225
    %v1686 = vpack.c.b16 %v1230, %v1228
    %v1687 = vpack.c.b16 %v1231, %v1229
    %v1688 = vpack.c.b16 %v1234, %v1232
    %v1689 = vpack.c.b16 %v1235, %v1233
    %v1690 = vpack.c.b16 %v1238, %v1236
    %v1691 = vpack.c.b16 %v1239, %v1237
    %v1692 = vpack.c.b16 %v1242, %v1240
    %v1693 = vpack.c.b16 %v1243, %v1241
    %v1694 = vpack.c.b16 %v1246, %v1244
    %v1695 = vpack.c.b16 %v1247, %v1245
    %v1696 = vpack.c.b16 %v1250, %v1248
    %v1697 = vpack.c.b16 %v1251, %v1249
    %v1698 = vpack.c.b16 %v1254, %v1252
    %v1699 = vpack.c.b16 %v1255, %v1253
    %v1700 = vpack.c.b16 %v1258, %v1256
    %v1701 = vpack.c.b16 %v1259, %v1257
    %v1702 = vpack.c.b16 %v1262, %v1260
    %v1703 = vpack.c.b16 %v1263, %v1261
    %v1704 = vpack.c.b16 %v1266, %v1264
    %v1705 = vpack.c.b16 %v1267, %v1265
    %v1706 = vpack.c.b16 %v1270, %v1268
    %v1707 = vpack.c.b16 %v1271, %v1269
    %v1708 = vpack.c.b16 %v1274, %v1272
    %v1709 = vpack.c.b16 %v1275, %v1273
    %v1710 = vpack.c.b16 %v1278, %v1276
    %v1711 = vpack.c.b16 %v1279, %v1277
    %v1712 = vpack.c.b16 %v1282, %v1280
    %v1713 = vpack.c.b16 %v1283, %v1281
    %v1714 = vpack.c.b16 %v1286, %v1284
    %v1715 = vpack.c.b16 %v1287, %v1285
    %v1716 = vpack.c.b16 %v1290, %v1288
    %v1717 = vpack.c.b16 %v1291, %v1289
    %v1718 = vpack.c.b16 %v1294, %v1292
    %v1719 = vpack.c.b16 %v1295, %v1293
    %v1720 = vpack.c.b16 %v1298, %v1296
    %v1721 = vpack.c.b16 %v1299, %v1297
    %v1722 = vpack.c.b16 %v1302, %v1300
    %v1723 = vpack.c.b16 %v1303, %v1301
    %v1724 = vpack.c.b16 %v1306, %v1304
    %v1725 = vpack.c.b16 %v1307, %v1305
    %v1726 = vpack.c.b16 %v1310, %v1308
    %v1727 = vpack.c.b16 %v1311, %v1309
    %v1728 = vpack.c.b16 %v1314, %v1312
    %v1729 = vpack.c.b16 %v1315, %v1313
    %v1730 = vpack.c.b16 %v1318, %v1316
    %v1731 = vpack.c.b16 %v1319, %v1317
    %v1732 = vpack.c.b16 %v1322, %v1320
    %v1733 = vpack.c.b16 %v1323, %v1321
    %v1734 = vpack.c.b16 %v1326, %v1324
    %v1735 = vpack.c.b16 %v1327, %v1325
    %v1736 = vpack.c.b16 %v1330, %v1328
    %v1737 = vpack.c.b16 %v1331, %v1329
    %v1738 = vpack.c.b16 %v1334, %v1332
    %v1739 = vpack.c.b16 %v1335, %v1333
    %v1740 = vpack.c.b16 %v1338, %v1336
    %v1741 = vpack.c.b16 %v1339, %v1337
    %v1742 = vpack.c.b16 %v1342, %v1340
    %v1743 = vpack.c.b16 %v1343, %v1341
    %v1744 = vpack.c.b16 %v1346, %v1344
    %v1745 = vpack.c.b16 %v1347, %v1345
    %v1746 = vpack.c.b16 %v1350, %v1348
    %v1747 = vpack.c.b16 %v1351, %v1349
    %v1748 = vpack.c.b16 %v1354, %v1352
    %v1749 = vpack.c.b16 %v1355, %v1353
    %v1750 = vpack.c.b16 %v1358, %v1356
    %v1751 = vpack.c.b16 %v1359, %v1357
    %v1752 = vpack.c.b16 %v1362, %v1360
    %v1753 = vpack.c.b16 %v1363, %v1361
    %v1754 = vpack.c.b16 %v1366, %v1364
    %v1755 = vpack.c.b16 %v1367, %v1365
    %v1756 = vpack.c.b16 %v1370, %v1368
    %v1757 = vpack.c.b16 %v1371, %v1369
    %v1758 = vpack.c.b16 %v1374, %v1372
    %v1759 = vpack.c.b16 %v1375, %v1373
    %v1760 = vpack.c.b16 %v1378, %v1376
    %v1761 = vpack.c.b16 %v1379, %v1377
    %v1762 = vpack.c.b16 %v1382, %v1380
    %v1763 = vpack.c.b16 %v1383, %v1381
    %v1764 = vpack.c.b16 %v1386, %v1384
    %v1765 = vpack.c.b16 %v1387, %v1385
    %v1766 = vpack.c.b16 %v1390, %v1388
    %v1767 = vpack.c.b16 %v1391, %v1389
    %v1768 = vpack.c.b16 %v1394, %v1392
    %v1769 = vpack.c.b16 %v1395, %v1393
    %v1770 = vpack.c.b16 %v1398, %v1396
    %v1771 = vpack.c.b16 %v1399, %v1397
    %v1772 = vpack.c.b16 %v1402, %v1400
    %v1773 = vpack.c.b16 %v1403, %v1401
    %v1774 = vpack.c.b16 %v1406, %v1404
    %v1775 = vpack.c.b16 %v1407, %v1405
    %v1776 = vpack.c.b16 %v1410, %v1408
    %v1777 = vpack.c.b16 %v1411, %v1409
    %v1778 = vpack.c.b16 %v1414, %v1412
    %v1779 = vpack.c.b16 %v1415, %v1413
    %v1780 = vpack.c.b16 %v1418, %v1416
    %v1781 = vpack.c.b16 %v1419, %v1417
    %v1782 = vpack.c.b16 %v1422, %v1420
    %v1783 = vpack.c.b16 %v1423, %v1421
    %v1784 = vpack.c.b16 %v1426, %v1424
    %v1785 = vpack.c.b16 %v1427, %v1425
    %v1786 = vpack.c.b16 %v1430, %v1428
    %v1787 = vpack.c.b16 %v1431, %v1429
    %v1788 = vpack.c.b16 %v1434, %v1432
    %v1789 = vpack.c.b16 %v1435, %v1433
    %v1790 = vpack.c.b16 %v1438, %v1436
    %v1791 = vpack.c.b16 %v1439, %v1437
    %v1792 = vpack.c.b16 %v1442, %v1440
    %v1793 = vpack.c.b16 %v1443, %v1441
    %v1794 = vpack.c.b16 %v1446, %v1444
    %v1795 = vpack.c.b16 %v1447, %v1445
    %v1796 = vpack.c.b16 %v1450, %v1448
    %v1797 = vpack.c.b16 %v1451, %v1449
    %v1798 = vpack.c.b16 %v1454, %v1452
    %v1799 = vpack.c.b16 %v1455, %v1453
    %v1800 = vpack.c.b16 %v1458, %v1456
    %v1801 = vpack.c.b16 %v1459, %v1457
    %v1802 = vpack.c.b16 %v1462, %v1460
    %v1803 = vpack.c.b16 %v1463, %v1461
    %v1804 = vpack.c.b16 %v1466, %v1464
    %v1805 = vpack.c.b16 %v1467, %v1465
    %v1806 = vpack.c.b16 %v1470, %v1468
    %v1807 = vpack.c.b16 %v1471, %v1469
    %v1808 = vpack.c.b16 %v1474, %v1472
    %v1809 = vpack.c.b16 %v1475, %v1473
    %v1810 = vpack.c.b16 %v1478, %v1476
    %v1811 = vpack.c.b16 %v1479, %v1477
    %v1812 = vpack.c.b16 %v1482, %v1480
    %v1813 = vpack.c.b16 %v1483, %v1481
    %v1814 = vpack.c.b16 %v1486, %v1484
    %v1815 = vpack.c.b16 %v1487, %v1485
    %v1816 = vpack.c.b16 %v1490, %v1488
    %v1817 = vpack.c.b16 %v1491, %v1489
    %v1818 = vpack.c.b16 %v1494, %v1492
    %v1819 = vpack.c.b16 %v1495, %v1493
    %v1820 = vpack.c.b16 %v1498, %v1496
    %v1821 = vpack.c.b16 %v1499, %v1497
    %v1822 = vpack.c.b16 %v1502, %v1500
    %v1823 = vpack.c.b16 %v1503, %v1501
    %2144 = vmatprep.subr.bf16.mxu0 %v1505
    %2145 = vmatpush1.bf16.msra.mxu0 %v1504
    %2146 = vmatprep.subr.bf16.mxu0 %v1507
    %2147 = vmatpush1.bf16.msra.mxu0 %v1506
    %2148 = vmatprep.subr.bf16.mxu0 %v1509
    %2149 = vmatpush1.bf16.msra.mxu0 %v1508
    %2150 = vmatprep.subr.bf16.mxu0 %v1511
    %2151 = vmatpush1.bf16.msra.mxu0 %v1510
    %2152 = vmatprep.subr.bf16.mxu0 %v1513
    %2153 = vmatpush1.bf16.msra.mxu0 %v1512
    %2154 = vmatprep.subr.bf16.mxu0 %v1515
    %2155 = vmatpush1.bf16.msra.mxu0 %v1514
    %2156 = vmatprep.subr.bf16.mxu0 %v1517
    %2157 = vmatpush1.bf16.msra.mxu0 %v1516
    %2158 = vmatprep.subr.bf16.mxu0 %v1519
    %2159 = vmatpush1.bf16.msra.mxu0 %v1518
    %2160 = vmatprep.subr.bf16.mxu0 %v1521
    %2161 = vmatpush1.bf16.msra.mxu0 %v1520
    %2162 = vmatprep.subr.bf16.mxu0 %v1523
    %2163 = vmatpush1.bf16.msra.mxu0 %v1522
    %2164 = vmatprep.subr.bf16.mxu0 %v1525
    %2165 = vmatpush1.bf16.msra.mxu0 %v1524
    %2166 = vmatprep.subr.bf16.mxu0 %v1527
    %2167 = vmatpush1.bf16.msra.mxu0 %v1526
    %2168 = vmatprep.subr.bf16.mxu0 %v1529
    %2169 = vmatpush1.bf16.msra.mxu0 %v1528
    %2170 = vmatprep.subr.bf16.mxu0 %v1531
    %2171 = vmatpush1.bf16.msra.mxu0 %v1530
    %2172 = vmatprep.subr.bf16.mxu0 %v1533
    %2173 = vmatpush1.bf16.msra.mxu0 %v1532
    %2174 = vmatprep.subr.bf16.mxu0 %v1535
    %2175 = vmatpush1.bf16.msra.mxu0 %v1534
    %2176 = vmatprep.mubr.bf16.mxu0 %v505
    %2177 = vmatmul.mubr.bf16.gmra.mrb[0].mxu0 %v504
    %v2178 = vpop.f32.mrb[0].mxu0
    %v2179 = vadd.f32 %v467, %v2178
    %v2180 = vpop.f32.mrb[0].mxu0
    %v2181 = vadd.f32 %v471, %v2180
    %v2182 = vpop.f32.mrb[0].mxu0
    %v2183 = vpop.f32.mrb[0].mxu0
    %2184 = vdwg.mxu0
    %2185 = vmatprep.subr.bf16.mxu0 %v1537
    %2186 = vmatpush1.bf16.msra.mxu0 %v1536
    %2187 = vmatprep.subr.bf16.mxu0 %v1539
    %2188 = vmatpush1.bf16.msra.mxu0 %v1538
    %2189 = vmatprep.subr.bf16.mxu0 %v1541
    %2190 = vmatpush1.bf16.msra.mxu0 %v1540
    %2191 = vmatprep.subr.bf16.mxu0 %v1543
    %2192 = vmatpush1.bf16.msra.mxu0 %v1542
    %2193 = vmatprep.subr.bf16.mxu0 %v1545
    %2194 = vmatpush1.bf16.msra.mxu0 %v1544
    %2195 = vmatprep.subr.bf16.mxu0 %v1547
    %2196 = vmatpush1.bf16.msra.mxu0 %v1546
    %2197 = vmatprep.subr.bf16.mxu0 %v1549
    %2198 = vmatpush1.bf16.msra.mxu0 %v1548
    %2199 = vmatprep.subr.bf16.mxu0 %v1551
    %2200 = vmatpush1.bf16.msra.mxu0 %v1550
    %2201 = vmatprep.subr.bf16.mxu0 %v1553
    %2202 = vmatpush1.bf16.msra.mxu0 %v1552
    %2203 = vmatprep.subr.bf16.mxu0 %v1555
    %2204 = vmatpush1.bf16.msra.mxu0 %v1554
    %2205 = vmatprep.subr.bf16.mxu0 %v1557
    %2206 = vmatpush1.bf16.msra.mxu0 %v1556
    %2207 = vmatprep.subr.bf16.mxu0 %v1559
    %2208 = vmatpush1.bf16.msra.mxu0 %v1558
    %2209 = vmatprep.subr.bf16.mxu0 %v1561
    %2210 = vmatpush1.bf16.msra.mxu0 %v1560
    %2211 = vmatprep.subr.bf16.mxu0 %v1563
    %2212 = vmatpush1.bf16.msra.mxu0 %v1562
    %2213 = vmatprep.subr.bf16.mxu0 %v1565
    %2214 = vmatpush1.bf16.msra.mxu0 %v1564
    %2215 = vmatprep.subr.bf16.mxu0 %v1567
    %2216 = vmatpush1.bf16.msra.mxu0 %v1566
    %2217 = vmatprep.mubr.bf16.mxu0 %v507
    %2218 = vmatmul.mubr.bf16.gmra.mrb[0].mxu0 %v506
    %v2219 = vpop.f32.mrb[0].mxu0
    %v2220 = vadd.f32 %v2179, %v2219
    %v2221 = vpop.f32.mrb[0].mxu0
    %v2222 = vadd.f32 %v2181, %v2221
    %v2223 = vpop.f32.mrb[0].mxu0
    %v2224 = vpop.f32.mrb[0].mxu0
    %2225 = vdwg.mxu0
    %2226 = vmatprep.subr.bf16.mxu0 %v1569
    %2227 = vmatpush1.bf16.msra.mxu0 %v1568
    %2228 = vmatprep.subr.bf16.mxu0 %v1571
    %2229 = vmatpush1.bf16.msra.mxu0 %v1570
    %2230 = vmatprep.subr.bf16.mxu0 %v1573
    %2231 = vmatpush1.bf16.msra.mxu0 %v1572
    %2232 = vmatprep.subr.bf16.mxu0 %v1575
    %2233 = vmatpush1.bf16.msra.mxu0 %v1574
    %2234 = vmatprep.subr.bf16.mxu0 %v1577
    %2235 = vmatpush1.bf16.msra.mxu0 %v1576
    %2236 = vmatprep.subr.bf16.mxu0 %v1579
    %2237 = vmatpush1.bf16.msra.mxu0 %v1578
    %2238 = vmatprep.subr.bf16.mxu0 %v1581
    %2239 = vmatpush1.bf16.msra.mxu0 %v1580
    %2240 = vmatprep.subr.bf16.mxu0 %v1583
    %2241 = vmatpush1.bf16.msra.mxu0 %v1582
    %2242 = vmatprep.subr.bf16.mxu0 %v1585
    %2243 = vmatpush1.bf16.msra.mxu0 %v1584
    %2244 = vmatprep.subr.bf16.mxu0 %v1587
    %2245 = vmatpush1.bf16.msra.mxu0 %v1586
    %2246 = vmatprep.subr.bf16.mxu0 %v1589
    %2247 = vmatpush1.bf16.msra.mxu0 %v1588
    %2248 = vmatprep.subr.bf16.mxu0 %v1591
    %2249 = vmatpush1.bf16.msra.mxu0 %v1590
    %2250 = vmatprep.subr.bf16.mxu0 %v1593
    %2251 = vmatpush1.bf16.msra.mxu0 %v1592
    %2252 = vmatprep.subr.bf16.mxu0 %v1595
    %2253 = vmatpush1.bf16.msra.mxu0 %v1594
    %2254 = vmatprep.subr.bf16.mxu0 %v1597
    %2255 = vmatpush1.bf16.msra.mxu0 %v1596
    %2256 = vmatprep.subr.bf16.mxu0 %v1599
    %2257 = vmatpush1.bf16.msra.mxu0 %v1598
    %2258 = vmatprep.mubr.bf16.mxu0 %v509
    %2259 = vmatmul.mubr.bf16.gmra.mrb[0].mxu0 %v508
    %v2260 = vpop.f32.mrb[0].mxu0
    %v2261 = vadd.f32 %v2220, %v2260
    %v2262 = vpop.f32.mrb[0].mxu0
    %v2263 = vadd.f32 %v2222, %v2262
    %v2264 = vpop.f32.mrb[0].mxu0
    %v2265 = vpop.f32.mrb[0].mxu0
    %2266 = vdwg.mxu0
    %2267 = vmatprep.subr.bf16.mxu0 %v1601
    %2268 = vmatpush1.bf16.msra.mxu0 %v1600
    %2269 = vmatprep.subr.bf16.mxu0 %v1603
    %2270 = vmatpush1.bf16.msra.mxu0 %v1602
    %2271 = vmatprep.subr.bf16.mxu0 %v1605
    %2272 = vmatpush1.bf16.msra.mxu0 %v1604
    %2273 = vmatprep.subr.bf16.mxu0 %v1607
    %2274 = vmatpush1.bf16.msra.mxu0 %v1606
    %2275 = vmatprep.subr.bf16.mxu0 %v1609
    %2276 = vmatpush1.bf16.msra.mxu0 %v1608
    %2277 = vmatprep.subr.bf16.mxu0 %v1611
    %2278 = vmatpush1.bf16.msra.mxu0 %v1610
    %2279 = vmatprep.subr.bf16.mxu0 %v1613
    %2280 = vmatpush1.bf16.msra.mxu0 %v1612
    %2281 = vmatprep.subr.bf16.mxu0 %v1615
    %2282 = vmatpush1.bf16.msra.mxu0 %v1614
    %2283 = vmatprep.subr.bf16.mxu0 %v1617
    %2284 = vmatpush1.bf16.msra.mxu0 %v1616
    %2285 = vmatprep.subr.bf16.mxu0 %v1619
    %2286 = vmatpush1.bf16.msra.mxu0 %v1618
    %2287 = vmatprep.subr.bf16.mxu0 %v1621
    %2288 = vmatpush1.bf16.msra.mxu0 %v1620
    %2289 = vmatprep.subr.bf16.mxu0 %v1623
    %2290 = vmatpush1.bf16.msra.mxu0 %v1622
    %2291 = vmatprep.subr.bf16.mxu0 %v1625
    %2292 = vmatpush1.bf16.msra.mxu0 %v1624
    %2293 = vmatprep.subr.bf16.mxu0 %v1627
    %2294 = vmatpush1.bf16.msra.mxu0 %v1626
    %2295 = vmatprep.subr.bf16.mxu0 %v1629
    %2296 = vmatpush1.bf16.msra.mxu0 %v1628
    %2297 = vmatprep.subr.bf16.mxu0 %v1631
    %2298 = vmatpush1.bf16.msra.mxu0 %v1630
    %2299 = vmatprep.mubr.bf16.mxu0 %v511
    %2300 = vmatmul.mubr.bf16.gmra.mrb[0].mxu0 %v510
    %v2301 = vpop.f32.mrb[0].mxu0
    %v2302 = vadd.f32 %v2261, %v2301
    %v2303 = vpop.f32.mrb[0].mxu0
    %v2304 = vadd.f32 %v2263, %v2303
    %v2305 = vpop.f32.mrb[0].mxu0
    %v2306 = vpop.f32.mrb[0].mxu0
    %2307 = vdwg.mxu0
    %2308 = vmatprep.subr.bf16.mxu0 %v1633
    %2309 = vmatpush1.bf16.msra.mxu0 %v1632
    %2310 = vmatprep.subr.bf16.mxu0 %v1635
    %2311 = vmatpush1.bf16.msra.mxu0 %v1634
    %2312 = vmatprep.subr.bf16.mxu0 %v1637
    %2313 = vmatpush1.bf16.msra.mxu0 %v1636
    %2314 = vmatprep.subr.bf16.mxu0 %v1639
    %2315 = vmatpush1.bf16.msra.mxu0 %v1638
    %2316 = vmatprep.subr.bf16.mxu0 %v1641
    %2317 = vmatpush1.bf16.msra.mxu0 %v1640
    %2318 = vmatprep.subr.bf16.mxu0 %v1643
    %2319 = vmatpush1.bf16.msra.mxu0 %v1642
    %2320 = vmatprep.subr.bf16.mxu0 %v1645
    %2321 = vmatpush1.bf16.msra.mxu0 %v1644
    %2322 = vmatprep.subr.bf16.mxu0 %v1647
    %2323 = vmatpush1.bf16.msra.mxu0 %v1646
    %2324 = vmatprep.subr.bf16.mxu0 %v1649
    %2325 = vmatpush1.bf16.msra.mxu0 %v1648
    %2326 = vmatprep.subr.bf16.mxu0 %v1651
    %2327 = vmatpush1.bf16.msra.mxu0 %v1650
    %2328 = vmatprep.subr.bf16.mxu0 %v1653
    %2329 = vmatpush1.bf16.msra.mxu0 %v1652
    %2330 = vmatprep.subr.bf16.mxu0 %v1655
    %2331 = vmatpush1.bf16.msra.mxu0 %v1654
    %2332 = vmatprep.subr.bf16.mxu0 %v1657
    %2333 = vmatpush1.bf16.msra.mxu0 %v1656
    %2334 = vmatprep.subr.bf16.mxu0 %v1659
    %2335 = vmatpush1.bf16.msra.mxu0 %v1658
    %2336 = vmatprep.subr.bf16.mxu0 %v1661
    %2337 = vmatpush1.bf16.msra.mxu0 %v1660
    %2338 = vmatprep.subr.bf16.mxu0 %v1663
    %2339 = vmatpush1.bf16.msra.mxu0 %v1662
    %2340 = vmatprep.mubr.bf16.mxu0 %v513
    %2341 = vmatmul.mubr.bf16.gmra.mrb[0].mxu0 %v512
    %v2342 = vpop.f32.mrb[0].mxu0
    %v2343 = vadd.f32 %v2302, %v2342
    %v2344 = vpop.f32.mrb[0].mxu0
    %v2345 = vadd.f32 %v2304, %v2344
    %v2346 = vpop.f32.mrb[0].mxu0
    %v2347 = vpop.f32.mrb[0].mxu0
    %2348 = vdwg.mxu0
    %2349 = vmatprep.subr.bf16.mxu0 %v1665
    %2350 = vmatpush1.bf16.msra.mxu0 %v1664
    %2351 = vmatprep.subr.bf16.mxu0 %v1667
    %2352 = vmatpush1.bf16.msra.mxu0 %v1666
    %2353 = vmatprep.subr.bf16.mxu0 %v1669
    %2354 = vmatpush1.bf16.msra.mxu0 %v1668
    %2355 = vmatprep.subr.bf16.mxu0 %v1671
    %2356 = vmatpush1.bf16.msra.mxu0 %v1670
    %2357 = vmatprep.subr.bf16.mxu0 %v1673
    %2358 = vmatpush1.bf16.msra.mxu0 %v1672
    %2359 = vmatprep.subr.bf16.mxu0 %v1675
    %2360 = vmatpush1.bf16.msra.mxu0 %v1674
    %2361 = vmatprep.subr.bf16.mxu0 %v1677
    %2362 = vmatpush1.bf16.msra.mxu0 %v1676
    %2363 = vmatprep.subr.bf16.mxu0 %v1679
    %2364 = vmatpush1.bf16.msra.mxu0 %v1678
    %2365 = vmatprep.subr.bf16.mxu0 %v1681
    %2366 = vmatpush1.bf16.msra.mxu0 %v1680
    %2367 = vmatprep.subr.bf16.mxu0 %v1683
    %2368 = vmatpush1.bf16.msra.mxu0 %v1682
    %2369 = vmatprep.subr.bf16.mxu0 %v1685
    %2370 = vmatpush1.bf16.msra.mxu0 %v1684
    %2371 = vmatprep.subr.bf16.mxu0 %v1687
    %2372 = vmatpush1.bf16.msra.mxu0 %v1686
    %2373 = vmatprep.subr.bf16.mxu0 %v1689
    %2374 = vmatpush1.bf16.msra.mxu0 %v1688
    %2375 = vmatprep.subr.bf16.mxu0 %v1691
    %2376 = vmatpush1.bf16.msra.mxu0 %v1690
    %2377 = vmatprep.subr.bf16.mxu0 %v1693
    %2378 = vmatpush1.bf16.msra.mxu0 %v1692
    %2379 = vmatprep.subr.bf16.mxu0 %v1695
    %2380 = vmatpush1.bf16.msra.mxu0 %v1694
    %2381 = vmatprep.mubr.bf16.mxu0 %v515
    %2382 = vmatmul.mubr.bf16.gmra.mrb[0].mxu0 %v514
    %v2383 = vpop.f32.mrb[0].mxu0
    %v2384 = vadd.f32 %v2343, %v2383
    %v2385 = vpop.f32.mrb[0].mxu0
    %v2386 = vadd.f32 %v2345, %v2385
    %v2387 = vpop.f32.mrb[0].mxu0
    %v2388 = vpop.f32.mrb[0].mxu0
    %2389 = vdwg.mxu0
    %2390 = vmatprep.subr.bf16.mxu0 %v1697
    %2391 = vmatpush1.bf16.msra.mxu0 %v1696
    %2392 = vmatprep.subr.bf16.mxu0 %v1699
    %2393 = vmatpush1.bf16.msra.mxu0 %v1698
    %2394 = vmatprep.subr.bf16.mxu0 %v1701
    %2395 = vmatpush1.bf16.msra.mxu0 %v1700
    %2396 = vmatprep.subr.bf16.mxu0 %v1703
    %2397 = vmatpush1.bf16.msra.mxu0 %v1702
    %2398 = vmatprep.subr.bf16.mxu0 %v1705
    %2399 = vmatpush1.bf16.msra.mxu0 %v1704
    %2400 = vmatprep.subr.bf16.mxu0 %v1707
    %2401 = vmatpush1.bf16.msra.mxu0 %v1706
    %2402 = vmatprep.subr.bf16.mxu0 %v1709
    %2403 = vmatpush1.bf16.msra.mxu0 %v1708
    %2404 = vmatprep.subr.bf16.mxu0 %v1711
    %2405 = vmatpush1.bf16.msra.mxu0 %v1710
    %2406 = vmatprep.subr.bf16.mxu0 %v1713
    %2407 = vmatpush1.bf16.msra.mxu0 %v1712
    %2408 = vmatprep.subr.bf16.mxu0 %v1715
    %2409 = vmatpush1.bf16.msra.mxu0 %v1714
    %2410 = vmatprep.subr.bf16.mxu0 %v1717
    %2411 = vmatpush1.bf16.msra.mxu0 %v1716
    %2412 = vmatprep.subr.bf16.mxu0 %v1719
    %2413 = vmatpush1.bf16.msra.mxu0 %v1718
    %2414 = vmatprep.subr.bf16.mxu0 %v1721
    %2415 = vmatpush1.bf16.msra.mxu0 %v1720
    %2416 = vmatprep.subr.bf16.mxu0 %v1723
    %2417 = vmatpush1.bf16.msra.mxu0 %v1722
    %2418 = vmatprep.subr.bf16.mxu0 %v1725
    %2419 = vmatpush1.bf16.msra.mxu0 %v1724
    %2420 = vmatprep.subr.bf16.mxu0 %v1727
    %2421 = vmatpush1.bf16.msra.mxu0 %v1726
    %2422 = vmatprep.mubr.bf16.mxu0 %v517
    %2423 = vmatmul.mubr.bf16.gmra.mrb[0].mxu0 %v516
    %v2424 = vpop.f32.mrb[0].mxu0
    %v2425 = vadd.f32 %v2384, %v2424
    %v2426 = vpop.f32.mrb[0].mxu0
    %v2427 = vadd.f32 %v2386, %v2426
    %v2428 = vpop.f32.mrb[0].mxu0
    %v2429 = vpop.f32.mrb[0].mxu0
    %2430 = vdwg.mxu0
    %2431 = vmatprep.subr.bf16.mxu0 %v1729
    %2432 = vmatpush1.bf16.msra.mxu0 %v1728
    %2433 = vmatprep.subr.bf16.mxu0 %v1731
    %2434 = vmatpush1.bf16.msra.mxu0 %v1730
    %2435 = vmatprep.subr.bf16.mxu0 %v1733
    %2436 = vmatpush1.bf16.msra.mxu0 %v1732
    %2437 = vmatprep.subr.bf16.mxu0 %v1735
    %2438 = vmatpush1.bf16.msra.mxu0 %v1734
    %2439 = vmatprep.subr.bf16.mxu0 %v1737
    %2440 = vmatpush1.bf16.msra.mxu0 %v1736
    %2441 = vmatprep.subr.bf16.mxu0 %v1739
    %2442 = vmatpush1.bf16.msra.mxu0 %v1738
    %2443 = vmatprep.subr.bf16.mxu0 %v1741
    %2444 = vmatpush1.bf16.msra.mxu0 %v1740
    %2445 = vmatprep.subr.bf16.mxu0 %v1743
    %2446 = vmatpush1.bf16.msra.mxu0 %v1742
    %2447 = vmatprep.subr.bf16.mxu0 %v1745
    %2448 = vmatpush1.bf16.msra.mxu0 %v1744
    %2449 = vmatprep.subr.bf16.mxu0 %v1747
    %2450 = vmatpush1.bf16.msra.mxu0 %v1746
    %2451 = vmatprep.subr.bf16.mxu0 %v1749
    %2452 = vmatpush1.bf16.msra.mxu0 %v1748
    %2453 = vmatprep.subr.bf16.mxu0 %v1751
    %2454 = vmatpush1.bf16.msra.mxu0 %v1750
    %2455 = vmatprep.subr.bf16.mxu0 %v1753
    %2456 = vmatpush1.bf16.msra.mxu0 %v1752
    %2457 = vmatprep.subr.bf16.mxu0 %v1755
    %2458 = vmatpush1.bf16.msra.mxu0 %v1754
    %2459 = vmatprep.subr.bf16.mxu0 %v1757
    %2460 = vmatpush1.bf16.msra.mxu0 %v1756
    %2461 = vmatprep.subr.bf16.mxu0 %v1759
    %2462 = vmatpush1.bf16.msra.mxu0 %v1758
    %2463 = vmatprep.mubr.bf16.mxu0 %v519
    %2464 = vmatmul.mubr.bf16.gmra.mrb[0].mxu0 %v518
    %v2465 = vpop.f32.mrb[0].mxu0
    %v2466 = vadd.f32 %v2425, %v2465
    %v2467 = vpop.f32.mrb[0].mxu0
    %v2468 = vadd.f32 %v2427, %v2467
    %v2469 = vpop.f32.mrb[0].mxu0
    %v2470 = vpop.f32.mrb[0].mxu0
    %2471 = vdwg.mxu0
    %2472 = vmatprep.subr.bf16.mxu0 %v1761
    %2473 = vmatpush1.bf16.msra.mxu0 %v1760
    %2474 = vmatprep.subr.bf16.mxu0 %v1763
    %2475 = vmatpush1.bf16.msra.mxu0 %v1762
    %2476 = vmatprep.subr.bf16.mxu0 %v1765
    %2477 = vmatpush1.bf16.msra.mxu0 %v1764
    %2478 = vmatprep.subr.bf16.mxu0 %v1767
    %2479 = vmatpush1.bf16.msra.mxu0 %v1766
    %2480 = vmatprep.subr.bf16.mxu0 %v1769
    %2481 = vmatpush1.bf16.msra.mxu0 %v1768
    %2482 = vmatprep.subr.bf16.mxu0 %v1771
    %2483 = vmatpush1.bf16.msra.mxu0 %v1770
    %2484 = vmatprep.subr.bf16.mxu0 %v1773
    %2485 = vmatpush1.bf16.msra.mxu0 %v1772
    %2486 = vmatprep.subr.bf16.mxu0 %v1775
    %2487 = vmatpush1.bf16.msra.mxu0 %v1774
    %2488 = vmatprep.subr.bf16.mxu0 %v1777
    %2489 = vmatpush1.bf16.msra.mxu0 %v1776
    %2490 = vmatprep.subr.bf16.mxu0 %v1779
    %2491 = vmatpush1.bf16.msra.mxu0 %v1778
    %2492 = vmatprep.subr.bf16.mxu0 %v1781
    %2493 = vmatpush1.bf16.msra.mxu0 %v1780
    %2494 = vmatprep.subr.bf16.mxu0 %v1783
    %2495 = vmatpush1.bf16.msra.mxu0 %v1782
    %2496 = vmatprep.subr.bf16.mxu0 %v1785
    %2497 = vmatpush1.bf16.msra.mxu0 %v1784
    %2498 = vmatprep.subr.bf16.mxu0 %v1787
    %2499 = vmatpush1.bf16.msra.mxu0 %v1786
    %2500 = vmatprep.subr.bf16.mxu0 %v1789
    %2501 = vmatpush1.bf16.msra.mxu0 %v1788
    %2502 = vmatprep.subr.bf16.mxu0 %v1791
    %2503 = vmatpush1.bf16.msra.mxu0 %v1790
    %2504 = vmatprep.mubr.bf16.mxu0 %v521
    %2505 = vmatmul.mubr.bf16.gmra.mrb[0].mxu0 %v520
    %v2506 = vpop.f32.mrb[0].mxu0
    %v2507 = vadd.f32 %v2466, %v2506
    %v2508 = vpop.f32.mrb[0].mxu0
    %v2509 = vadd.f32 %v2468, %v2508
    %v2510 = vpop.f32.mrb[0].mxu0
    %v2511 = vpop.f32.mrb[0].mxu0
    %2512 = vdwg.mxu0
    %2513 = vmatprep.subr.bf16.mxu0 %v1793
    %2514 = vmatpush1.bf16.msra.mxu0 %v1792
    %2515 = vmatprep.subr.bf16.mxu0 %v1795
    %2516 = vmatpush1.bf16.msra.mxu0 %v1794
    %2517 = vmatprep.subr.bf16.mxu0 %v1797
    %2518 = vmatpush1.bf16.msra.mxu0 %v1796
    %2519 = vmatprep.subr.bf16.mxu0 %v1799
    %2520 = vmatpush1.bf16.msra.mxu0 %v1798
    %2521 = vmatprep.subr.bf16.mxu0 %v1801
    %2522 = vmatpush1.bf16.msra.mxu0 %v1800
    %2523 = vmatprep.subr.bf16.mxu0 %v1803
    %2524 = vmatpush1.bf16.msra.mxu0 %v1802
    %2525 = vmatprep.subr.bf16.mxu0 %v1805
    %2526 = vmatpush1.bf16.msra.mxu0 %v1804
    %2527 = vmatprep.subr.bf16.mxu0 %v1807
    %2528 = vmatpush1.bf16.msra.mxu0 %v1806
    %2529 = vmatprep.subr.bf16.mxu0 %v1809
    %2530 = vmatpush1.bf16.msra.mxu0 %v1808
    %2531 = vmatprep.subr.bf16.mxu0 %v1811
    %2532 = vmatpush1.bf16.msra.mxu0 %v1810
    %2533 = vmatprep.subr.bf16.mxu0 %v1813
    %2534 = vmatpush1.bf16.msra.mxu0 %v1812
    %2535 = vmatprep.subr.bf16.mxu0 %v1815
    %2536 = vmatpush1.bf16.msra.mxu0 %v1814
    %2537 = vmatprep.subr.bf16.mxu0 %v1817
    %2538 = vmatpush1.bf16.msra.mxu0 %v1816
    %2539 = vmatprep.subr.bf16.mxu0 %v1819
    %2540 = vmatpush1.bf16.msra.mxu0 %v1818
    %2541 = vmatprep.subr.bf16.mxu0 %v1821
    %2542 = vmatpush1.bf16.msra.mxu0 %v1820
    %2543 = vmatprep.subr.bf16.mxu0 %v1823
    %2544 = vmatpush1.bf16.msra.mxu0 %v1822
    %2545 = vmatprep.mubr.bf16.mxu0 %v523
    %2546 = vmatmul.mubr.bf16.gmra.mrb[0].mxu0 %v522
    %v2547 = vpop.f32.mrb[0].mxu0
    %v2548 = vadd.f32 %v2507, %v2547
    %v2549 = vpop.f32.mrb[0].mxu0
    %v2550 = vadd.f32 %v2509, %v2549
    %v2551 = vpop.f32.mrb[0].mxu0
    %v2552 = vpop.f32.mrb[0].mxu0
    %2553 = vdwg.mxu0
    %v2554 = vmax.f32 %v2548, 0.0
    %v2555 = vmax.f32 %v2550, 0.0
    %v2556 = vld [vmem:[#allocation8] sm:$0xff]
    %v2557 = vld [vmem:[#allocation8 + $0x8] sm:$0xff]
    %v2558 = vld [vmem:[#allocation8 + $0x10] sm:$0xff]
    %v2559 = vld [vmem:[#allocation8 + $0x18] sm:$0xff]
    %v2560 = vld [vmem:[#allocation8 + $0x20] sm:$0xff]
    %v2561 = vld [vmem:[#allocation8 + $0x28] sm:$0xff]
    %v2562 = vld [vmem:[#allocation8 + $0x30] sm:$0xff]
    %v2563 = vld [vmem:[#allocation8 + $0x38] sm:$0xff]
    %v2564 = vld [vmem:[#allocation8 + $0x40] sm:$0xff]
    %v2565 = vld [vmem:[#allocation8 + $0x48] sm:$0xff]
    %v2566 = vld [vmem:[#allocation8 + $0x50] sm:$0xff]
    %v2567 = vld [vmem:[#allocation8 + $0x58] sm:$0xff]
    %v2568 = vld [vmem:[#allocation8 + $0x60] sm:$0xff]
    %v2569 = vld [vmem:[#allocation8 + $0x68] sm:$0xff]
    %v2570 = vld [vmem:[#allocation8 + $0x70] sm:$0xff]
    %v2571 = vld [vmem:[#allocation8 + $0x78] sm:$0xff]
    %v2572 = vld [vmem:[#allocation8 + $0x80] sm:$0xff]
    %v2573 = vld [vmem:[#allocation8 + $0x88] sm:$0xff]
    %v2574 = vld [vmem:[#allocation8 + $0x90] sm:$0xff]
    %v2575 = vld [vmem:[#allocation8 + $0x98] sm:$0xff]
    %v2576 = vld [vmem:[#allocation8 + $0xa0] sm:$0xff]
    %v2577 = vld [vmem:[#allocation8 + $0xa8] sm:$0xff]
    %v2578 = vld [vmem:[#allocation8 + $0xb0] sm:$0xff]
    %v2579 = vld [vmem:[#allocation8 + $0xb8] sm:$0xff]
    %v2580 = vld [vmem:[#allocation8 + $0xc0] sm:$0xff]
    %v2581 = vld [vmem:[#allocation8 + $0xc8] sm:$0xff]
    %v2582 = vld [vmem:[#allocation8 + $0xd0] sm:$0xff]
    %v2583 = vld [vmem:[#allocation8 + $0xd8] sm:$0xff]
    %v2584 = vld [vmem:[#allocation8 + $0xe0] sm:$0xff]
    %v2585 = vld [vmem:[#allocation8 + $0xe8] sm:$0xff]
    %v2586 = vld [vmem:[#allocation8 + $0xf0] sm:$0xff]
    %v2587 = vld [vmem:[#allocation8 + $0xf8] sm:$0xff]
    %v2588 = vld [vmem:[#allocation10] sm:$0x1]
    %v2590 = vlaneseq
    %v2591 = vshrl.u32 %v2590, 7
    %v2592 = vsub.s32 0, %v2591
    %v2593 = vrot.slane %v2588, %v2592
    %2595 = vmatprep.subr.mxu0 0.0
    %2596 = vmatpush1.msra.mxu0 %v2556
    %2597 = vmatprep.subr.mxu0 0.0
    %2598 = vmatpush1.msra.mxu0 %v2557
    %2599 = vmatprep.subr.mxu0 0.0
    %2600 = vmatpush1.msra.mxu0 %v2558
    %2601 = vmatprep.subr.mxu0 0.0
    %2602 = vmatpush1.msra.mxu0 %v2559
    %2603 = vmatprep.subr.mxu0 0.0
    %2604 = vmatpush1.msra.mxu0 %v2560
    %2605 = vmatprep.subr.mxu0 0.0
    %2606 = vmatpush1.msra.mxu0 %v2561
    %2607 = vmatprep.subr.mxu0 0.0
    %2608 = vmatpush1.msra.mxu0 %v2562
    %2609 = vmatprep.subr.mxu0 0.0
    %2610 = vmatpush1.msra.mxu0 %v2563
    %2611 = vmatprep.subr.mxu0 0.0
    %2612 = vmatpush1.msra.mxu0 %v2564
    %2613 = vmatprep.subr.mxu0 0.0
    %2614 = vmatpush1.msra.mxu0 %v2565
    %2615 = vmatprep.subr.mxu0 0.0
    %2616 = vmatpush1.msra.mxu0 %v2566
    %2617 = vmatprep.subr.mxu0 0.0
    %2618 = vmatpush1.msra.mxu0 %v2567
    %2619 = vmatprep.subr.mxu0 0.0
    %2620 = vmatpush1.msra.mxu0 %v2568
    %2621 = vmatprep.subr.mxu0 0.0
    %2622 = vmatpush1.msra.mxu0 %v2569
    %2623 = vmatprep.subr.mxu0 0.0
    %2624 = vmatpush1.msra.mxu0 %v2570
    %2625 = vmatprep.subr.mxu0 0.0
    %2626 = vmatpush1.msra.mxu0 %v2571
    %2627 = vmatprep.subr.mxu0 0.0
    %2628 = vmatpush1.msra.mxu0 %v2572
    %2629 = vmatprep.subr.mxu0 0.0
    %2630 = vmatpush1.msra.mxu0 %v2573
    %2631 = vmatprep.subr.mxu0 0.0
    %2632 = vmatpush1.msra.mxu0 %v2574
    %2633 = vmatprep.subr.mxu0 0.0
    %2634 = vmatpush1.msra.mxu0 %v2575
    %2635 = vmatprep.subr.mxu0 0.0
    %2636 = vmatpush1.msra.mxu0 %v2576
    %2637 = vmatprep.subr.mxu0 0.0
    %2638 = vmatpush1.msra.mxu0 %v2577
    %2639 = vmatprep.subr.mxu0 0.0
    %2640 = vmatpush1.msra.mxu0 %v2578
    %2641 = vmatprep.subr.mxu0 0.0
    %2642 = vmatpush1.msra.mxu0 %v2579
    %2643 = vmatprep.subr.mxu0 0.0
    %2644 = vmatpush1.msra.mxu0 %v2580
    %2645 = vmatprep.subr.mxu0 0.0
    %2646 = vmatpush1.msra.mxu0 %v2581
    %2647 = vmatprep.subr.mxu0 0.0
    %2648 = vmatpush1.msra.mxu0 %v2582
    %2649 = vmatprep.subr.mxu0 0.0
    %2650 = vmatpush1.msra.mxu0 %v2583
    %2651 = vmatprep.subr.mxu0 0.0
    %2652 = vmatpush1.msra.mxu0 %v2584
    %2653 = vmatprep.subr.mxu0 0.0
    %2654 = vmatpush1.msra.mxu0 %v2585
    %2655 = vmatprep.subr.mxu0 0.0
    %2656 = vmatpush1.msra.mxu0 %v2586
    %2657 = vmatprep.subr.mxu0 0.0
    %2658 = vmatpush1.msra.mxu0 %v2587
    %2659 = vmatprep.mubr.f32.mxu0 %v2555
    %2660 = vmatmul.mubr.f32.gmra.mrb[0].mxu0 %v2554
    %v2661 = vpop.f32.mrb[0].mxu0
    %v2662 = vadd.f32 %v2593, %v2661
    %v2663 = vpop.f32.mrb[0].mxu0
    %2664 = vdwg.mxu0
    %v2665 = vmax.f32 %v2662, 0.0
    %v2666 = vld [vmem:[%s5] sm:$0xff]
    %v2667 = vld [vmem:[%s5 + $0x8] sm:$0xff]
    %v2668 = vld [vmem:[%s5 + $0x10] sm:$0xff]
    %v2669 = vld [vmem:[%s5 + $0x18] sm:$0xff]
    %v2670 = vld [vmem:[%s5 + $0x20] sm:$0xff]
    %v2671 = vld [vmem:[%s5 + $0x28] sm:$0xff]
    %v2672 = vld [vmem:[%s5 + $0x30] sm:$0xff]
    %v2673 = vld [vmem:[%s5 + $0x38] sm:$0xff]
    %v2674 = vld [vmem:[%s5 + $0x40] sm:$0xff]
    %v2675 = vld [vmem:[%s5 + $0x48] sm:$0xff]
    %v2676 = vld [vmem:[%s5 + $0x50] sm:$0xff]
    %v2677 = vld [vmem:[%s5 + $0x58] sm:$0xff]
    %v2678 = vld [vmem:[%s5 + $0x60] sm:$0xff]
    %v2679 = vld [vmem:[%s5 + $0x68] sm:$0xff]
    %v2680 = vld [vmem:[%s5 + $0x70] sm:$0xff]
    %v2681 = vld [vmem:[%s5 + $0x78] sm:$0xff]
    %v2682 = vld [vmem:[#allocation11] sm:$0x1]
    %v2684 = vlaneseq
    %v2685 = vshrl.u32 %v2684, 7
    %v2686 = vsub.s32 0, %v2685
    %v2687 = vrot.slane %v2682, %v2686
    %2689 = vmatprep.subr.mxu0 0.0
    %2690 = vmatpush1.msra.mxu0 %v2666
    %2691 = vmatprep.subr.mxu0 0.0
    %2692 = vmatpush1.msra.mxu0 %v2667
    %2693 = vmatprep.subr.mxu0 0.0
    %2694 = vmatpush1.msra.mxu0 %v2668
    %2695 = vmatprep.subr.mxu0 0.0
    %2696 = vmatpush1.msra.mxu0 %v2669
    %2697 = vmatprep.subr.mxu0 0.0
    %2698 = vmatpush1.msra.mxu0 %v2670
    %2699 = vmatprep.subr.mxu0 0.0
    %2700 = vmatpush1.msra.mxu0 %v2671
    %2701 = vmatprep.subr.mxu0 0.0
    %2702 = vmatpush1.msra.mxu0 %v2672
    %2703 = vmatprep.subr.mxu0 0.0
    %2704 = vmatpush1.msra.mxu0 %v2673
    %2705 = vmatprep.subr.mxu0 0.0
    %2706 = vmatpush1.msra.mxu0 %v2674
    %2707 = vmatprep.subr.mxu0 0.0
    %2708 = vmatpush1.msra.mxu0 %v2675
    %2709 = vmatprep.subr.mxu0 0.0
    %2710 = vmatpush1.msra.mxu0 %v2676
    %2711 = vmatprep.subr.mxu0 0.0
    %2712 = vmatpush1.msra.mxu0 %v2677
    %2713 = vmatprep.subr.mxu0 0.0
    %2714 = vmatpush1.msra.mxu0 %v2678
    %2715 = vmatprep.subr.mxu0 0.0
    %2716 = vmatpush1.msra.mxu0 %v2679
    %2717 = vmatprep.subr.mxu0 0.0
    %2718 = vmatpush1.msra.mxu0 %v2680
    %2719 = vmatprep.subr.mxu0 0.0
    %2720 = vmatpush1.msra.mxu0 %v2681
    %2721 = vmatprep.subr.mxu0 0.0
    %2722 = vmatpush1.msra.mxu0 0.0
    %2723 = vmatprep.subr.mxu0 0.0
    %2724 = vmatpush1.msra.mxu0 0.0
    %2725 = vmatprep.subr.mxu0 0.0
    %2726 = vmatpush1.msra.mxu0 0.0
    %2727 = vmatprep.subr.mxu0 0.0
    %2728 = vmatpush1.msra.mxu0 0.0
    %2729 = vmatprep.subr.mxu0 0.0
    %2730 = vmatpush1.msra.mxu0 0.0
    %2731 = vmatprep.subr.mxu0 0.0
    %2732 = vmatpush1.msra.mxu0 0.0
    %2733 = vmatprep.subr.mxu0 0.0
    %2734 = vmatpush1.msra.mxu0 0.0
    %2735 = vmatprep.subr.mxu0 0.0
    %2736 = vmatpush1.msra.mxu0 0.0
    %2737 = vmatprep.subr.mxu0 0.0
    %2738 = vmatpush1.msra.mxu0 0.0
    %2739 = vmatprep.subr.mxu0 0.0
    %2740 = vmatpush1.msra.mxu0 0.0
    %2741 = vmatprep.subr.mxu0 0.0
    %2742 = vmatpush1.msra.mxu0 0.0
    %2743 = vmatprep.subr.mxu0 0.0
    %2744 = vmatpush1.msra.mxu0 0.0
    %2745 = vmatprep.subr.mxu0 0.0
    %2746 = vmatpush1.msra.mxu0 0.0
    %2747 = vmatprep.subr.mxu0 0.0
    %2748 = vmatpush1.msra.mxu0 0.0
    %2749 = vmatprep.subr.mxu0 0.0
    %2750 = vmatpush1.msra.mxu0 0.0
    %2751 = vmatprep.subr.mxu0 0.0
    %2752 = vmatpush1.msra.mxu0 0.0
    %2753 = vmatprep.mubr.f32.mxu0 0.0
    %2754 = vmatmul.mubr.f32.gmra.mrb[0].mxu0 %v2665
    %v2755 = vpop.f32.mrb[0].mxu0
    %v2756 = vadd.f32 %v2687, %v2755
    %v2757 = vpop.f32.mrb[0].mxu0
    %2758 = vdwg.mxu0
    %v2759 = vmax.f32 %v2756, 0.0
    %v2760 = vld [vmem:[#allocation13] sm:$0xff]
    %v2761 = vld [vmem:[#allocation13 + $0x8] sm:$0xff]
    %v2762 = vld [vmem:[#allocation13 + $0x10] sm:$0xff]
    %v2763 = vld [vmem:[#allocation13 + $0x18] sm:$0xff]
    %v2764 = vld [vmem:[#allocation13 + $0x20] sm:$0xff]
    %v2765 = vld [vmem:[#allocation13 + $0x28] sm:$0xff]
    %v2766 = vld [vmem:[#allocation13 + $0x30] sm:$0xff]
    %v2767 = vld [vmem:[#allocation13 + $0x38] sm:$0xff]
    %v2768 = vld [vmem:[#allocation14] sm:$0x1]
    %v2770 = vlaneseq
    %v2771 = vshrl.u32 %v2770, 7
    %v2772 = vsub.s32 0, %v2771
    %v2773 = vrot.slane %v2768, %v2772
    %vm2775 = vcmask 523264
    %v2777 = vsel %vm2775, %v2759, 0
    %2779 = vmatprep.subr.mxu0 0.0
    %2780 = vmatpush1.msra.mxu0 %v2760
    %2781 = vmatprep.subr.mxu0 0.0
    %2782 = vmatpush1.msra.mxu0 %v2761
    %2783 = vmatprep.subr.mxu0 0.0
    %2784 = vmatpush1.msra.mxu0 %v2762
    %2785 = vmatprep.subr.mxu0 0.0
    %2786 = vmatpush1.msra.mxu0 %v2763
    %2787 = vmatprep.subr.mxu0 0.0
    %2788 = vmatpush1.msra.mxu0 %v2764
    %2789 = vmatprep.subr.mxu0 0.0
    %2790 = vmatpush1.msra.mxu0 %v2765
    %2791 = vmatprep.subr.mxu0 0.0
    %2792 = vmatpush1.msra.mxu0 %v2766
    %2793 = vmatprep.subr.mxu0 0.0
    %2794 = vmatpush1.msra.mxu0 %v2767
    %2795 = vmatprep.subr.mxu0 0.0
    %2796 = vmatpush1.msra.mxu0 0.0
    %2797 = vmatprep.subr.mxu0 0.0
    %2798 = vmatpush1.msra.mxu0 0.0
    %2799 = vmatprep.subr.mxu0 0.0
    %2800 = vmatpush1.msra.mxu0 0.0
    %2801 = vmatprep.subr.mxu0 0.0
    %2802 = vmatpush1.msra.mxu0 0.0
    %2803 = vmatprep.subr.mxu0 0.0
    %2804 = vmatpush1.msra.mxu0 0.0
    %2805 = vmatprep.subr.mxu0 0.0
    %2806 = vmatpush1.msra.mxu0 0.0
    %2807 = vmatprep.subr.mxu0 0.0
    %2808 = vmatpush1.msra.mxu0 0.0
    %2809 = vmatprep.subr.mxu0 0.0
    %2810 = vmatpush1.msra.mxu0 0.0
    %2811 = vmatprep.subr.mxu0 0.0
    %2812 = vmatpush1.msra.mxu0 0.0
    %2813 = vmatprep.subr.mxu0 0.0
    %2814 = vmatpush1.msra.mxu0 0.0
    %2815 = vmatprep.subr.mxu0 0.0
    %2816 = vmatpush1.msra.mxu0 0.0
    %2817 = vmatprep.subr.mxu0 0.0
    %2818 = vmatpush1.msra.mxu0 0.0
    %2819 = vmatprep.subr.mxu0 0.0
    %2820 = vmatpush1.msra.mxu0 0.0
    %2821 = vmatprep.subr.mxu0 0.0
    %2822 = vmatpush1.msra.mxu0 0.0
    %2823 = vmatprep.subr.mxu0 0.0
    %2824 = vmatpush1.msra.mxu0 0.0
    %2825 = vmatprep.subr.mxu0 0.0
    %2826 = vmatpush1.msra.mxu0 0.0
    %2827 = vmatprep.subr.mxu0 0.0
    %2828 = vmatpush1.msra.mxu0 0.0
    %2829 = vmatprep.subr.mxu0 0.0
    %2830 = vmatpush1.msra.mxu0 0.0
    %2831 = vmatprep.subr.mxu0 0.0
    %2832 = vmatpush1.msra.mxu0 0.0
    %2833 = vmatprep.subr.mxu0 0.0
    %2834 = vmatpush1.msra.mxu0 0.0
    %2835 = vmatprep.subr.mxu0 0.0
    %2836 = vmatpush1.msra.mxu0 0.0
    %2837 = vmatprep.subr.mxu0 0.0
    %2838 = vmatpush1.msra.mxu0 0.0
    %2839 = vmatprep.subr.mxu0 0.0
    %2840 = vmatpush1.msra.mxu0 0.0
    %2841 = vmatprep.subr.mxu0 0.0
    %2842 = vmatpush1.msra.mxu0 0.0
    %2843 = vmatprep.mubr.f32.mxu0 0.0
    %2844 = vmatmul.mubr.f32.gmra.mrb[0].mxu0 %v2777
    %v2845 = vpop.f32.mrb[0].mxu0
    %v2846 = vadd.f32 %v2773, %v2845
    %v2847 = vpop.f32.mrb[0].mxu0
    %2848 = vdwg.mxu0
    %2849 = vmax.xlane.f32.xlu0 %v2846
    %v2850 = vpop.xlane.xlu0 %2849
    %v2851 = vsub.f32 %v2846, %v2850
    %v2852 = vmul.f32 %v2851, 1.442695
    %v2853 = vpow.pop %v2852
    %2854 = vadd.xlane.f32.xlu0 %v2853
    %v2855 = vpop.xlane.xlu0 %2854
    %v2856 = vlog2.pop %v2855
    %v2857 = vmul.f32 %v2856, 0.6931472
    %v2858 = vadd.f32 %v2850, %v2857
    %v2859 = vsub.f32 %v2846, %v2858
    %2860 = vst [vmem:[#allocation16] sm:$0xff] %v2859
    // Predicated region
    $region70: #{tpu_custom_call.1} parent=1 // pred_check
      _
    $region71: #{tpu_custom_call.1} parent=1 // pred_check_branch
      %2862 = sbr.rel (0) target = $region73
    $region72: #{tpu_custom_call.1} parent=1 // pred_region
      %s2864 = ssub.s32 128, 128
      %2865 = vsyncadd [#allocation4], %s2864
      %s2867 = sshll.u32 [#allocation16], 4
      %s2868 = int_to_ptr.vmem [resolvable:$true] %s2867
      %2870 = dma.vmem_to_hbm [thread:$0]  %s2868, 128, %s9, [#allocation4]
    $region73: #{tpu_custom_call.1} parent=1 // pred_fallthru
      _
    // Predicated region
    $region74: #{tpu_custom_call.1} parent=1 // pred_check
      _
    $region75: #{tpu_custom_call.1} parent=1 // pred_check_branch
      %2872 = sbr.rel (0) target = $region77
    $region76: #{tpu_custom_call.1} parent=1 // pred_region
      %2873 = dma.done [#allocation4], 128
    $region77: #{tpu_custom_call.1} parent=1 // pred_fallthru
      _
    %2874 = vsyncpa [#allocation3], 1
    %2875 = vsyncpa [#allocation6], 1
    %2876 = vsyncpa [#allocation9], 1
    %2877 = vsyncpa [#allocation12], 1
    %2878 = vsyncpa [#allocation15], 1
    %2879 = vsyncpa [#allocation4], 1

</llo_original>
